<compile_context>
chip_gen: v5e
topology: v5e:2x2
jax: 0.10.0
libtpu: 0.0.40
codegen_flags: <defaults>
</compile_context>

<pallas_src>
import jax
import jax.numpy as jnp
from jax.experimental import pallas as pl
from jax.experimental.pallas import tpu as pltpu

KH = KW = 4
STRIDE = 2
PAD = 1
BN_EPS = 1e-5
LEAKY_SLOPE = 0.1


# --------------------------------------------------------------------------- #
# Kernel A (small channels): shared 3x3 im2col, ONE matmul -> (M, 4*Co).
# --------------------------------------------------------------------------- #
def _convtrans_fused9_kernel(x_ref, w_ref, o_ref, s_ref):
    # x_ref : (1, TR+2, W+2, Ci)  bf16   input row-tile with 1px halo
    # w_ref : (9*Ci, 4*Co)        bf16   phase-stacked, zero-padded weights
    # o_ref : (1, TR*W, 4*Co)     bf16   conv output, phase-major channel layout
    # s_ref : (1, 2, 4*Co)        f32    per-tile [sum ; sum-of-squares]
    _, trp2, wp2, ci = x_ref.shape
    tr, w = trp2 - 2, wp2 - 2
    m = tr * w

    x = x_ref[0]                                            # (TR+2, W+2, Ci)
    taps = [x[oy:oy + tr, ox:ox + w, :]
            for oy in range(3) for ox in range(3)]
    lhs = jnp.concatenate(taps, axis=-1).reshape(m, 9 * ci)  # (M, 9*Ci)
    y = jnp.dot(lhs, w_ref[...], preferred_element_type=jnp.float32)  # (M, 4*Co)

    s = jnp.sum(y, axis=0, keepdims=True)                   # (1, 4*Co)
    ss = jnp.sum(y * y, axis=0, keepdims=True)               # (1, 4*Co)
    s_ref[0] = jnp.concatenate([s, ss], axis=0)              # (2, 4*Co)
    o_ref[0] = y.astype(o_ref.dtype)


# --------------------------------------------------------------------------- #
# Kernel B (large channels): 4 per-phase im2col-fused matmuls (K = 4*Ci each).
# --------------------------------------------------------------------------- #
def _convtrans_phase_kernel(x_ref, w_ref, o_ref, s_ref):
    # x_ref : (1, TR+2, W+2, Ci)  bf16
    # w_ref : (4, 4*Ci, Co)       bf16   per-phase fused weights (resident)
    # o_ref : (1, TR*W, 4*Co)     bf16
    # s_ref : (1, 2, 4*Co)        f32
    _, trp2, wp2, ci = x_ref.shape
    tr, w = trp2 - 2, wp2 - 2
    m = tr * w

    x = x_ref[0]
    cols = []
    for a in range(2):                                      # output-row parity
        for b in range(2):                                  # output-col parity
            taps = [x[a + dy:a + dy + tr, b + dx:b + dx + w, :]
                    for dy in range(2) for dx in range(2)]
            lhs = jnp.concatenate(taps, axis=-1).reshape(m, 4 * ci)
            cols.append(jnp.dot(lhs, w_ref[2 * a + b],
                                preferred_element_type=jnp.float32))
    y = jnp.concatenate(cols, axis=-1)                      # (M, 4*Co) fp32

    s = jnp.sum(y, axis=0, keepdims=True)
    ss = jnp.sum(y * y, axis=0, keepdims=True)
    s_ref[0] = jnp.concatenate([s, ss], axis=0)
    o_ref[0] = y.astype(o_ref.dtype)


# --------------------------------------------------------------------------- #
# VMEM-budgeted row-tile selection.
# --------------------------------------------------------------------------- #
def _pick_row_tile(H, W, Ci, Co, use9):
    """Largest divisor of H whose estimated working set fits a conservative
    VMEM budget (valid across v5e/v6e/v7x with weights resident)."""
    tap_k = 9 * Ci if use9 else 4 * Ci

    def est_bytes(tr):
        m = tr * W
        in_tile = (tr + 2) * (W + 2) * Ci * 2          # bf16, double-buffered
        out_tile = m * 4 * Co * 2                      # bf16, double-buffered
        stats = 2 * 4 * Co * 4
        temps = m * tap_k * 2 + m * 4 * Co * 4          # im2col lhs + fp32 accum
        return 2 * (in_tile + out_tile + stats) + temps

    budget = 10 * 1024 * 1024
    best = 1
    for d in range(1, H + 1):
        if H % d == 0 and est_bytes(d) <= budget:
            best = d
    return best


# --------------------------------------------------------------------------- #
# Wrapper.
# --------------------------------------------------------------------------- #
def _conv_trans2d_block_impl(x_nchw, w_t, bias, gamma, beta,
                             row_tile=None, fused9=None):
    """ConvTranspose2d(Ci,Co,4,stride=2,padding=1) + BN(batch stats) + LeakyReLU.

    x_nchw: (N, Ci, H, W);  w_t: (Ci, Co, 4, 4) [PyTorch ConvTranspose2d layout].
    `bias` is accepted for interface parity but not used: it is mathematically
    cancelled by the train-mode BatchNorm mean subtraction.
    Returns (N, Co, 2H, 2W) float32.
    """
    del bias  # exactly cancelled by BN mean subtraction (train mode)
    N, Ci, H, W = x_nchw.shape
    Co = w_t.shape[1]
    Ho, Wo = STRIDE * H, STRIDE * W
    C4 = 4 * Co

    use9 = (4 * Ci < 128 and Co < 64) if fused9 is None else bool(fused9)
    TR = _pick_row_tile(H, W, Ci, Co, use9) if row_tile is None else int(row_tile)
    assert H % TR == 0, f"row tile {TR} must divide H={H}"
    nt = H // TR
    G = N * nt                       # grid tiles (prefer even G for v7x's 2 TCs)
    M = TR * W                       # output super-pixels per tile

    # --- layout plumbing: NCHW -> NHWC (bf16) + 1px halo pad
    x_nhwc = jnp.transpose(x_nchw, (0, 2, 3, 1)).astype(jnp.bfloat16)
    xpad = jnp.pad(x_nhwc, ((0, 0), (1, 1), (1, 1), (0, 0)))
    if nt == 1:
        xin = xpad                   # batch-only grid: no halo duplication/gather
    else:
        # TODO(synk): for very large H, replace this overlapping-halo gather with
        # memory_space=pl.ANY + pltpu.make_async_copy of the halo window per tile.
        row_idx = jnp.arange(nt)[:, None] * TR + jnp.arange(TR + 2)[None, :]
        xin = xpad[:, row_idx].reshape(G, TR + 2, W + 2, Ci)

    # --- weight preparation
    if use9:
        # W9[oy, ox, ci, p, co] = w_t[ci, co, 3+a-2*oy, 3+b-2*ox] where p = 2a+b,
        # nonzero only for oy in {a, a+1}, ox in {b, b+1} (zero-padded taps).
        w9 = jnp.zeros((3, 3, Ci, 4, Co), w_t.dtype)
        for a in (0, 1):
            for b in (0, 1):
                p = 2 * a + b
                for dy in (0, 1):
                    for dx in (0, 1):
                        oy, ox = a + dy, b + dx
                        kh, kw = 3 - a - 2 * dy, 3 - b - 2 * dx
                        w9 = w9.at[oy, ox, :, p, :].set(w_t[:, :, kh, kw])
        wmat = w9.reshape(9 * Ci, C4).astype(jnp.bfloat16)
        kernel = _convtrans_fused9_kernel
        w_block = (9 * Ci, C4)
        w_index_map = lambda i: (0, 0)
    else:
        # per-phase fused weights: Wp[dy,dx,ci,co] = w_t[ci, co, 3-a-2dy, 3-b-2dx]
        aa = jnp.array([0, 0, 1, 1]); bb = jnp.array([0, 1, 0, 1])    # phase -> (a,b)
        dys = jnp.array([0, 0, 1, 1]); dxs = jnp.array([0, 1, 0, 1])  # tap   -> (dy,dx)
        kh = 3 - aa[:, None] - 2 * dys[None, :]
        kw = 3 - bb[:, None] - 2 * dxs[None, :]
        wmat = jnp.transpose(w_t[:, :, kh, kw], (2, 3, 0, 1))         # (p,t,Ci,Co)
        wmat = wmat.reshape(4, 4 * Ci, Co).astype(jnp.bfloat16)
        kernel = _convtrans_phase_kernel
        w_block = (4, 4 * Ci, Co)
        w_index_map = lambda i: (0, 0, 0)

    # Single-buffer the resident weights only when the block is large enough to
    # matter (v7x VMEM headroom); tiny weights keep the default pipelining.
    w_kwargs = {}
    if int(wmat.size) * 2 > (2 << 20):
        w_kwargs["pipeline_mode"] = pl.Buffered(1)
    w_spec = pl.BlockSpec(w_block, w_index_map, **w_kwargs)

    params = pltpu.CompilerParams(
        dimension_semantics=("parallel",),
        vmem_limit_bytes=32 * 1024 * 1024,
    )

    # --- pass 1: tiled fused conv-transpose (bf16 out) + per-tile BN partial sums
    conv_ph, stats = pl.pallas_call(
        kernel,
        out_shape=(jax.ShapeDtypeStruct((G, M, C4), jnp.bfloat16),
                   jax.ShapeDtypeStruct((G, 2, C4), jnp.float32)),
        grid=(G,),
        in_specs=[
            pl.BlockSpec((1, TR + 2, W + 2, Ci), lambda i: (i, 0, 0, 0)),
            w_spec,
        ],
        out_specs=(
            pl.BlockSpec((1, M, C4), lambda i: (i, 0, 0)),
            pl.BlockSpec((1, 2, C4), lambda i: (i, 0, 0)),
        ),
        compiler_params=params,
    )(xin, wmat)

    # --- exact global batch statistics (biased variance, BatchNorm2d train mode)
    # TODO(synk): nn.BatchNorm2d also updates running_mean/running_var buffers
    # (module state, momentum); only the forward output (batch stats) is computed.
    # TODO(synk): for very large N*H*W switch to per-tile (count, mean, M2) +
    # Chan's parallel-variance combine to avoid E[x^2]-E[x]^2 cancellation.
    count = N * Ho * Wo
    tot = jnp.sum(stats, axis=0)                      # (2, 4*Co) fp32
    csum = tot[0].reshape(4, Co).sum(axis=0)          # (Co,)
    csqs = tot[1].reshape(4, Co).sum(axis=0)          # (Co,)
    mean = csum / count
    var = jnp.maximum(csqs / count - mean * mean, 0.0)
    inv = jax.lax.rsqrt(var + BN_EPS)
    scale = gamma.astype(jnp.float32) * inv
    shift = beta.astype(jnp.float32) - mean * scale
    scale4 = jnp.tile(scale, 4)                       # phase-major (4*Co,)
    shift4 = jnp.tile(shift, 4)

    # --- fused epilogue in plain JAX: BN apply + LeakyReLU + single de-interleave
    # transpose straight to NCHW (XLA fuses the elementwise into the transpose).
    y = conv_ph.astype(jnp.float32) * scale4 + shift4        # (G, M, 4*Co)
    y = jnp.where(y >= 0.0, y, LEAKY_SLOPE * y)
    y = y.reshape(N, H, W, 2, 2, Co)                         # (n, h, w, a, b, co)
    y = jnp.transpose(y, (0, 5, 1, 3, 2, 4))                 # (n, co, h, a, w, b)
    return y.reshape(N, Co, Ho, Wo)


conv_trans2d_block = jax.jit(_conv_trans2d_block_impl,
                             static_argnames=("row_tile", "fused9"))


def _reference(x_nchw, w_t, bias, gamma, beta):
    """Pure-JAX fp32 reference (includes the ConvTranspose2d bias)."""
    w_flip = jnp.flip(w_t, axis=(2, 3))                           # (Ci, Co, kh, kw)
    w_oihw = jnp.transpose(w_flip, (1, 0, 2, 3))                  # (Co, Ci, kh, kw)
    y = jax.lax.conv_general_dilated(
        x_nchw, w_oihw, window_strides=(1, 1),
        padding=[(2, 2), (2, 2)], lhs_dilation=(2, 2),
        dimension_numbers=("NCHW", "OIHW", "NCHW"))
    y = y + bias.reshape(1, -1, 1, 1)
    mean = jnp.mean(y, axis=(0, 2, 3), keepdims=True)
    var = jnp.mean((y - mean) ** 2, axis=(0, 2, 3), keepdims=True)
    y = (y - mean) * jax.lax.rsqrt(var + BN_EPS) * gamma.reshape(1, -1, 1, 1) \
        + beta.reshape(1, -1, 1, 1)
    return jnp.where(y >= 0.0, y, LEAKY_SLOPE * y)


if __name__ == "__main__":
    N, Ci, Co, H, W = 2, 4, 8, 16, 16

    key = jax.random.PRNGKey(0)
    kx, kw0, kb, kg, kbt = jax.random.split(key, 5)
    x = jax.random.normal(kx, (N, Ci, H, W), jnp.float32)
    w_t = 0.1 * jax.random.normal(kw0, (Ci, Co, KH, KW), jnp.float32)
    bias = 0.1 * jax.random.normal(kb, (Co,), jnp.float32)
    gamma = 1.0 + 0.1 * jax.random.normal(kg, (Co,), jnp.float32)
    beta = 0.1 * jax.random.normal(kbt, (Co,), jnp.float32)

    ref = _reference(x, w_t, bias, gamma, beta)

    def check(out, name, tol=4e-2):   # bf16 matmul operands + bf16 intermediate
        assert out.shape == (N, Co, 2 * H, 2 * W), (name, out.shape)
        err = float(jnp.max(jnp.abs(out - ref)))
        assert err < tol, f"{name}: max_err={err}"

    # Auto path: 9-tap single-matmul kernel, TR=H (batch-only grid, no halo gather).
    out = jax.block_until_ready(conv_trans2d_block(x, w_t, bias, gamma, beta))
    check(out, "fused9/auto")

    # Forced row tiling: exercises halo tiles + cross-tile BN reduction.
    out2 = jax.block_until_ready(
        conv_trans2d_block(x, w_t, bias, gamma, beta, row_tile=4))
    check(out2, "fused9/row_tile4")

    # Large-channel code path (per-phase 4-matmul kernel), forced at small shapes.
    out3 = jax.block_until_ready(
        conv_trans2d_block(x, w_t, bias, gamma, beta, fused9=False))
    check(out3, "phase4")

    print("KERNEL_OK")
</pallas_src>

<mosaic_0001>
module attributes {stable_mosaic.version = 11 : i64} {
  func.func @_convtrans_fused9_kernel(%arg0: i32, %arg1: memref<1x18x18x4xbf16, #tpu.memory_space<vmem>>, %arg2: memref<36x32xbf16, #tpu.memory_space<vmem>>, %arg3: memref<1x256x32xbf16, #tpu.memory_space<vmem>>, %arg4: memref<1x2x32xf32, #tpu.memory_space<vmem>>) attributes {dimension_semantics = [#tpu.dimension_semantics<parallel>], iteration_bounds = array<i64: 2>, scalar_prefetch = 0 : i64, scratch_operands = 0 : i64, tpu.core_type = #tpu.core_type<tc>, window_params = [{transform_indices = @transform_0, window_bounds = array<i64: 1, 18, 18, 4>}, {pipeline_mode = #tpu.pipeline_mode<synchronous>, transform_indices = @transform_1, window_bounds = array<i64: 36, 32>}, {transform_indices = @transform_2, window_bounds = array<i64: 1, 256, 32>}, {transform_indices = @transform_3, window_bounds = array<i64: 1, 2, 32>}]} {
    %c0 = arith.constant 0 : index
    %c0_0 = arith.constant 0 : index
    %c0_1 = arith.constant 0 : index
    %c0_2 = arith.constant 0 : index
    %0 = vector.load %arg1[%c0, %c0_0, %c0_1, %c0_2] : memref<1x18x18x4xbf16, #tpu.memory_space<vmem>>, vector<1x18x18x4xbf16>
    %1 = vector.shape_cast %0 : vector<1x18x18x4xbf16> to vector<18x18x4xbf16>
    %2 = vector.extract_strided_slice %1 {offsets = [0, 0, 0], sizes = [16, 16, 4], strides = [1, 1, 1]} : vector<18x18x4xbf16> to vector<16x16x4xbf16>
    %3 = vector.extract_strided_slice %1 {offsets = [0, 1, 0], sizes = [16, 16, 4], strides = [1, 1, 1]} : vector<18x18x4xbf16> to vector<16x16x4xbf16>
    %4 = vector.extract_strided_slice %1 {offsets = [0, 2, 0], sizes = [16, 16, 4], strides = [1, 1, 1]} : vector<18x18x4xbf16> to vector<16x16x4xbf16>
    %5 = vector.extract_strided_slice %1 {offsets = [1, 0, 0], sizes = [16, 16, 4], strides = [1, 1, 1]} : vector<18x18x4xbf16> to vector<16x16x4xbf16>
    %6 = vector.extract_strided_slice %1 {offsets = [1, 1, 0], sizes = [16, 16, 4], strides = [1, 1, 1]} : vector<18x18x4xbf16> to vector<16x16x4xbf16>
    %7 = vector.extract_strided_slice %1 {offsets = [1, 2, 0], sizes = [16, 16, 4], strides = [1, 1, 1]} : vector<18x18x4xbf16> to vector<16x16x4xbf16>
    %8 = vector.extract_strided_slice %1 {offsets = [2, 0, 0], sizes = [16, 16, 4], strides = [1, 1, 1]} : vector<18x18x4xbf16> to vector<16x16x4xbf16>
    %9 = vector.extract_strided_slice %1 {offsets = [2, 1, 0], sizes = [16, 16, 4], strides = [1, 1, 1]} : vector<18x18x4xbf16> to vector<16x16x4xbf16>
    %10 = vector.extract_strided_slice %1 {offsets = [2, 2, 0], sizes = [16, 16, 4], strides = [1, 1, 1]} : vector<18x18x4xbf16> to vector<16x16x4xbf16>
    %11 = tpu.concatenate %2, %3, %4, %5, %6, %7, %8, %9, %10 in 2 : vector<16x16x4xbf16>, vector<16x16x4xbf16>, vector<16x16x4xbf16>, vector<16x16x4xbf16>, vector<16x16x4xbf16>, vector<16x16x4xbf16>, vector<16x16x4xbf16>, vector<16x16x4xbf16>, vector<16x16x4xbf16> -> vector<16x16x36xbf16>
    %12 = vector.shape_cast %11 : vector<16x16x36xbf16> to vector<256x36xbf16>
    %c0_3 = arith.constant 0 : index
    %c0_4 = arith.constant 0 : index
    %13 = vector.load %arg2[%c0_3, %c0_4] : memref<36x32xbf16, #tpu.memory_space<vmem>>, vector<36x32xbf16>
    %cst = arith.constant dense<0.000000e+00> : vector<256x32xf32>
    %14 = tpu.matmul %12, %13, %cst {dimension_numbers = #tpu.dot_dimension_numbers<[1], [0], [0], [1], [0, 0, 1, 1], [], []>} : vector<256x36xbf16>, vector<36x32xbf16>, vector<256x32xf32> -> vector<256x32xf32>
    %cst_5 = arith.constant dense<0.000000e+00> : vector<32xf32>
    %15 = vector.multi_reduction <add>, %14, %cst_5 [0] : vector<256x32xf32> to vector<32xf32>
    %16 = vector.shape_cast %15 : vector<32xf32> to vector<1x32xf32>
    %17 = arith.mulf %14, %14 : vector<256x32xf32>
    %cst_6 = arith.constant dense<0.000000e+00> : vector<32xf32>
    %18 = vector.multi_reduction <add>, %17, %cst_6 [0] : vector<256x32xf32> to vector<32xf32>
    %19 = vector.shape_cast %18 : vector<32xf32> to vector<1x32xf32>
    %20 = tpu.concatenate %16, %19 in 0 : vector<1x32xf32>, vector<1x32xf32> -> vector<2x32xf32>
    %c0_7 = arith.constant 0 : index
    %c0_8 = arith.constant 0 : index
    %c0_9 = arith.constant 0 : index
    %21 = vector.load %arg4[%c0_7, %c0_8, %c0_9] : memref<1x2x32xf32, #tpu.memory_space<vmem>>, vector<1x2x32xf32>
    %22 = vector.shape_cast %21 : vector<1x2x32xf32> to vector<2x32xf32>
    %23 = vector.shape_cast %20 : vector<2x32xf32> to vector<1x2x32xf32>
    tpu.vector_store %arg4[%c0_7, %c0_8, %c0_9], %23 {strides = array<i32>} : memref<1x2x32xf32, #tpu.memory_space<vmem>>, vector<1x2x32xf32>,
    %24 = arith.truncf %14 : vector<256x32xf32> to vector<256x32xbf16>
    %c0_10 = arith.constant 0 : index
    %c0_11 = arith.constant 0 : index
    %c0_12 = arith.constant 0 : index
    %25 = vector.load %arg3[%c0_10, %c0_11, %c0_12] : memref<1x256x32xbf16, #tpu.memory_space<vmem>>, vector<1x256x32xbf16>
    %26 = vector.shape_cast %25 : vector<1x256x32xbf16> to vector<256x32xbf16>
    %27 = vector.shape_cast %24 : vector<256x32xbf16> to vector<1x256x32xbf16>
    tpu.vector_store %arg3[%c0_10, %c0_11, %c0_12], %27 {strides = array<i32>} : memref<1x256x32xbf16, #tpu.memory_space<vmem>>, vector<1x256x32xbf16>,
    return
  }
  func.func @transform_0(%arg0: i32) -> (i32, i32, i32, i32) {
    %c0_i32 = arith.constant 0 : i32
    %c0_i32_0 = arith.constant 0 : i32
    %c0_i32_1 = arith.constant 0 : i32
    %c0_i32_2 = arith.constant 0 : i32
    return %arg0, %c0_i32, %c0_i32_0, %c0_i32_1 : i32, i32, i32, i32
  }
  func.func @transform_1(%arg0: i32) -> (i32, i32) {
    %c0_i32 = arith.constant 0 : i32
    %c0_i32_0 = arith.constant 0 : i32
    %c0_i32_1 = arith.constant 0 : i32
    return %c0_i32, %c0_i32_0 : i32, i32
  }
  func.func @transform_2(%arg0: i32) -> (i32, i32, i32) {
    %c0_i32 = arith.constant 0 : i32
    %c0_i32_0 = arith.constant 0 : i32
    %c0_i32_1 = arith.constant 0 : i32
    return %arg0, %c0_i32, %c0_i32_0 : i32, i32, i32
  }
  func.func @transform_3(%arg0: i32) -> (i32, i32, i32) {
    %c0_i32 = arith.constant 0 : i32
    %c0_i32_0 = arith.constant 0 : i32
    %c0_i32_1 = arith.constant 0 : i32
    return %arg0, %c0_i32, %c0_i32_0 : i32, i32, i32
  }
}

</mosaic_0001>

<llo_original>
// kernel: squeeze.34
$region0: #{squeeze.34}
  %s0 = inlined_call_operand.vmem [shape: f32[32], index: 0, kind: input, shape index: {}]
  %s1 = inlined_call_operand.vmem [shape: f32[4,8], index: 1, kind: output, shape index: {}]
  $region1: #{squeeze.34} parent=0
    #allocation0 [shape = 'u8[4096]{0}', space=vmem, size = 0x1000, scoped, tag = 'scoped mem for output reshape']
    #allocation1 [shape = 'u8[4096]{0}', space=vmem, size = 0x1000, scoped, tag = 'scoped mem for input reshape']
    %s3 = ssub.s32 2, 1
    %v4 = vld [vmem:[%s0] sm:%s3]
    %5 = vst [vmem:[#allocation1] sm:%s3] %v4
    %v6 = vld [vmem:[#allocation1] sm:$0x1]
    %vm7 = vcmask 64512
    %8 = vst.msk [vmem:[#allocation0] sm:$0x1] %vm7, %v6
    %v9 = vld [vmem:[#allocation1] sm:$0x1]
    %10 = vrot.lane.b32.xlu0 %v9, 120
    %v11 = vpop.permute.xlu0 %10
    %vm12 = vcmask 64512
    %s13 = scalar_lea.vmem [#allocation0], 1
    %14 = vst.msk [vmem:[%s13] sm:$0x1] %vm12, %v11
    %v15 = vld [vmem:[#allocation1] sm:$0x1]
    %16 = vrot.lane.b32.xlu0 %v15, 112
    %v17 = vpop.permute.xlu0 %16
    %vm18 = vcmask 64512
    %s19 = scalar_lea.vmem [#allocation0], 2
    %20 = vst.msk [vmem:[%s19] sm:$0x1] %vm18, %v17
    %v21 = vld [vmem:[#allocation1] sm:$0x1]
    %22 = vrot.lane.b32.xlu0 %v21, 104
    %v23 = vpop.permute.xlu0 %22
    %vm24 = vcmask 64512
    %s25 = scalar_lea.vmem [#allocation0], 3
    %26 = vst.msk [vmem:[%s25] sm:$0x1] %vm24, %v23
    %s28 = ssub.s32 16, 1
    %v29 = vld [vmem:[#allocation0] sm:%s28]
    %s31 = ssub.s32 16, 1
    %32 = vst [vmem:[%s1] sm:%s31] %v29

// kernel: tile.17
$region0: #{tile.17}
  #allocation0 [shape = 's32[1]{0}', space=sflag, size = 0x4, scoped, tag = 'scoped memory for tile.17']
  %s0 = inlined_call_operand.vmem [shape: f32[8], index: 0, kind: input, shape index: {}]
  %s1 = inlined_call_operand.vmem [shape: f32[4,8], index: 1, kind: output, shape index: {}]
  // Predicated region
  $region2: #{tile.17} parent=0 // pred_check
    _
  $region3: #{tile.17} parent=0 // pred_check_branch
    %3 = sbr.rel (0) target = $region5
  $region4: #{tile.17} parent=0 // pred_region
    _
  $region5: #{tile.17} parent=0 // pred_fallthru
    _
  %v4 = vld [vmem:[%s0] ss:$0 sm:$0xff]
  %5 = vst [vmem:[%s1] sm:$0xf] %v4

// kernel: _conv_trans2d_block_impl.1
$region0: #{_conv_trans2d_block_impl.1}
  #allocation0 [shape = 'u32[]', space=smem, size = 0x4, offset = 0x4, fixed_abs, tag = 'smem constant byte address 0x4 - core index']
  #allocation1 [shape = 'u32[72,128]{1,0:T(1,128)}', space=vmem, size = 0x9000, scoped, tag = 'internal scratch']
  %s0 = inlined_call_operand.vmem [shape: bf16[2,18,18,4], index: 0, kind: input, shape index: {}]
  %s1 = inlined_call_operand.vmem [shape: bf16[36,32], index: 1, kind: input, shape index: {}]
  %s2 = inlined_call_operand.vmem [shape: bf16[2,256,32], index: 2, kind: output, shape index: {0}]
  %s3 = inlined_call_operand.vmem [shape: f32[2,2,32], index: 3, kind: output, shape index: {1}]
  %4 = xla_tuple %s2, %s3
  %s5 = sld [smem:[#allocation0]]
  $region49: #{_conv_trans2d_block_impl.1} parent=0
    _
  %s7 = ssub.s32 1, %s5
  %s8 = scalar_select 0, %s7, %s5
  loop: start=0, step=1, limit=4
  $region2: #{_conv_trans2d_block_impl.1} parent=0 // loop_pre_header
    _
  $region3: #{_conv_trans2d_block_impl.1} parent=0 // loop_header
    %s10 = sphi 0, %s14
    %p11 = scmp.ge.s32.totalorder %s10, 4
    %s20 = sphi 0, %s22
    %s23 = sphi 0, %s20
    %s24 = sphi 0, %s23
    %s40 = sphi 0, %s24
    %s44 = sphi 0, %s44
    %s46 = sphi 0, %s44
    %s47 = sphi 0, %s46
    %s61 = sphi 0, %s47
    %s67 = sphi 0, %s69
    %s70 = sphi 0, %s67
    %s71 = sphi 0, %s70
    %s87 = sphi 0, %s71
    %s93 = sphi 0, %s95
    %s96 = sphi 0, %s93
    %s97 = sphi 0, %s96
    %s113 = sphi 0, %s97
  $region4: #{_conv_trans2d_block_impl.1} parent=0 // loop_header_branch
    %13 = sbr.rel (%p11) target = $region8
  $region5: #{_conv_trans2d_block_impl.1} parent=0 // loop_body
    %s15 = ssub.s32 %s10, 1
    %s16 = ssub.s32 %s10, 2
    %s17 = sadd.s32 %s10, 1
    %s18 = ssub.s32 %s10, %s17
    %p19 = scmp.eq.s32.totalorder %s18, 0
    %s21 = sadd.s32 %s20, 1
    %s22 = scalar_select %p19, %s20, %s21
    %p25 = pneg %p19
    %p26 = scmp.eq.s32.totalorder %s10, 1
    %p27 = por %p25, %p26
    %p28 = scmp.ne.s32.totalorder %s20, %s23
    %p29 = scmp.eq.s32.totalorder %s10, 0
    %p30 = por %p28, %p29
    %p31 = scmp.ne.s32.totalorder %s20, %s23
    %p32 = scmp.eq.s32.totalorder %s15, 1
    %p33 = por %p31, %p32
    %p34 = scmp.ne.s32.totalorder %s23, %s24
    %p35 = scmp.eq.s32.totalorder %s15, 0
    %p36 = por %p34, %p35
    %p37 = scmp.ne.s32.totalorder %s23, %s24
    %p38 = scmp.eq.s32.totalorder %s16, 1
    %p39 = por %p37, %p38
    %p41 = scmp.ne.s32.totalorder %s24, %s40
    %p42 = scmp.eq.s32.totalorder %s16, 0
    %p43 = por %p41, %p42
    %s45 = sadd.s32 %s44, 1
    %p48 = scmp.eq.s32.totalorder %s10, 1
    %p49 = scmp.ne.s32.totalorder %s44, %s46
    %p50 = scmp.eq.s32.totalorder %s10, 0
    %p51 = por %p49, %p50
    %p52 = scmp.ne.s32.totalorder %s44, %s46
    %p53 = scmp.eq.s32.totalorder %s15, 1
    %p54 = por %p52, %p53
    %p55 = scmp.ne.s32.totalorder %s46, %s47
    %p56 = scmp.eq.s32.totalorder %s15, 0
    %p57 = por %p55, %p56
    %p58 = scmp.ne.s32.totalorder %s46, %s47
    %p59 = scmp.eq.s32.totalorder %s16, 1
    %p60 = por %p58, %p59
    %p62 = scmp.ne.s32.totalorder %s47, %s61
    %p63 = scmp.eq.s32.totalorder %s16, 0
    %p64 = por %p62, %p63
    %s65 = ssub.s32 %s10, %s17
    %p66 = scmp.eq.s32.totalorder %s65, 0
    %s68 = sadd.s32 %s67, 1
    %s69 = scalar_select %p66, %s67, %s68
    %p72 = pneg %p66
    %p73 = scmp.eq.s32.totalorder %s10, 1
    %p74 = por %p72, %p73
    %p75 = scmp.ne.s32.totalorder %s67, %s70
    %p76 = scmp.eq.s32.totalorder %s10, 0
    %p77 = por %p75, %p76
    %p78 = scmp.ne.s32.totalorder %s67, %s70
    %p79 = scmp.eq.s32.totalorder %s15, 1
    %p80 = por %p78, %p79
    %p81 = scmp.ne.s32.totalorder %s70, %s71
    %p82 = scmp.eq.s32.totalorder %s15, 0
    %p83 = por %p81, %p82
    %p84 = scmp.ne.s32.totalorder %s70, %s71
    %p85 = scmp.eq.s32.totalorder %s16, 1
    %p86 = por %p84, %p85
    %p88 = scmp.ne.s32.totalorder %s71, %s87
    %p89 = scmp.eq.s32.totalorder %s16, 0
    %p90 = por %p88, %p89
    %s91 = ssub.s32 %s10, %s17
    %p92 = scmp.eq.s32.totalorder %s91, 0
    %s94 = sadd.s32 %s93, 1
    %s95 = scalar_select %p92, %s93, %s94
    %p98 = pneg %p92
    %p99 = scmp.eq.s32.totalorder %s10, 1
    %p100 = por %p98, %p99
    %p101 = scmp.ne.s32.totalorder %s93, %s96
    %p102 = scmp.eq.s32.totalorder %s10, 0
    %p103 = por %p101, %p102
    %p104 = scmp.ne.s32.totalorder %s93, %s96
    %p105 = scmp.eq.s32.totalorder %s15, 1
    %p106 = por %p104, %p105
    %p107 = scmp.ne.s32.totalorder %s96, %s97
    %p108 = scmp.eq.s32.totalorder %s15, 0
    %p109 = por %p107, %p108
    %p110 = scmp.ne.s32.totalorder %s96, %s97
    %p111 = scmp.eq.s32.totalorder %s16, 1
    %p112 = por %p110, %p111
    %p114 = scmp.ne.s32.totalorder %s97, %s113
    %p115 = scmp.eq.s32.totalorder %s16, 0
    %p116 = por %p114, %p115
    %p117 = scmp.le.s32.totalorder 1, %s10
    %p118 = scmp.lt.s32.totalorder %s10, 3
    %p119 = pnand %p117, %p118
    %p120 = pneg %p119
    // Predicated region
    $region9: #{_conv_trans2d_block_impl.1} parent=5 // pred_check
      _
    $region10: #{_conv_trans2d_block_impl.1} parent=5 // pred_check_branch
      %122 = sbr.rel (%p119) target = $region12
    $region11: #{_conv_trans2d_block_impl.1} parent=5 // pred_region
      %s123 = ssub.s32 %s10, 1
      // Predicated region
      $region13: #{_conv_trans2d_block_impl.1} parent=11 // pred_check
        %p124 = pneg %p57
      $region14: #{_conv_trans2d_block_impl.1} parent=11 // pred_check_branch
        %126 = sbr.rel (%p124) target = $region16
      $region15: #{_conv_trans2d_block_impl.1} parent=11 // pred_region
        _
      $region16: #{_conv_trans2d_block_impl.1} parent=11 // pred_fallthru
        _
    $region12: #{_conv_trans2d_block_impl.1} parent=5 // pred_fallthru
      _
    %p127 = scmp.lt.s32.totalorder %s10, 2
    // Predicated region
    $region17: #{_conv_trans2d_block_impl.1} parent=5 // pred_check
      %p128 = pneg %p127
    $region18: #{_conv_trans2d_block_impl.1} parent=5 // pred_check_branch
      %130 = sbr.rel (%p128) target = $region20
    $region19: #{_conv_trans2d_block_impl.1} parent=5 // pred_region
      // Predicated region
      $region21: #{_conv_trans2d_block_impl.1} parent=19 // pred_check
        %p131 = pneg %p30
      $region22: #{_conv_trans2d_block_impl.1} parent=19 // pred_check_branch
        %133 = sbr.rel (%p131) target = $region24
      $region23: #{_conv_trans2d_block_impl.1} parent=19 // pred_region
        %p134 = scmp.lt.s32.totalorder %s10, 1
        %s135 = scalar_select %p134, %s10, 1
        %s136 = smul.addr %s135, 54
        %s137 = smul.addr %s136, 4
        %s138 = scalar_lea.vmem %s0, %s137
      $region24: #{_conv_trans2d_block_impl.1} parent=19 // pred_fallthru
        _
    $region20: #{_conv_trans2d_block_impl.1} parent=5 // pred_fallthru
      _
    %p139 = scmp.le.s32.totalorder 1, %s10
    %p140 = scmp.lt.s32.totalorder %s10, 3
    %p141 = pnand %p139, %p140
    %p142 = pneg %p141
    // Predicated region
    $region25: #{_conv_trans2d_block_impl.1} parent=5 // pred_check
      _
    $region26: #{_conv_trans2d_block_impl.1} parent=5 // pred_check_branch
      %144 = sbr.rel (%p141) target = $region28
    $region27: #{_conv_trans2d_block_impl.1} parent=5 // pred_region
      %s145 = ssub.s32 %s10, 1
      %p146 = scmp.lt.s32.totalorder %s15, 1
      %s147 = scalar_select %p146, %s15, 1
      %s148 = smul.addr %s147, 54
      %s149 = smul.addr %s148, 4
      %s150 = scalar_lea.vmem %s0, %s149
      %p151 = pneg %p36
      %p152 = pneg %p33
      %p153 = pneg %p57
      %p154 = pneg %p54
      %p155 = pneg %p83
      %p156 = pneg %p80
      %p157 = scmp.lt.s32.totalorder %s15, 1
      %s158 = scalar_select %p157, %s15, 1
      %s159 = smul.addr %s158, 32
      %s160 = smul.addr %s159, 4
      %s161 = scalar_lea.vmem %s2, %s160
      %p162 = pneg %p109
      %p163 = pneg %p106
      %p164 = scmp.lt.s32.totalorder %s15, 1
      %s165 = scalar_select %p164, %s15, 1
      %s166 = smul.addr %s165, 2
      %s167 = scalar_lea.vmem %s3, %s166
      %p168 = scmp.lt.s32.totalorder %s15, 1
      %s169 = scalar_select %p168, %s15, 1
      %s170 = smul.addr %s169, 54
      %s171 = smul.addr %s170, 4
      %s172 = scalar_lea.vmem %s0, %s171
      %p173 = scmp.lt.s32.totalorder %s15, 1
      %s174 = scalar_select %p173, %s15, 1
      %s175 = smul.addr %s174, 32
      %s176 = smul.addr %s175, 4
      %s177 = scalar_lea.vmem %s2, %s176
      %p178 = scmp.lt.s32.totalorder %s15, 1
      %s179 = scalar_select %p178, %s15, 1
      %s180 = smul.addr %s179, 2
      %s181 = scalar_lea.vmem %s3, %s180
      %v183 = vld [vmem:[%s172] sm:$0xf]
      %v184 = vld [vmem:[%s172 + $0x4] sm:$0xf]
      %v185 = vld [vmem:[%s172 + $0x8] sm:$0x1]
      %v186 = vld [vmem:[%s172 + $0xc] sm:$0xf]
      %v187 = vld [vmem:[%s172 + $0x10] sm:$0xf]
      %v188 = vld [vmem:[%s172 + $0x14] sm:$0x1]
      %v189 = vld [vmem:[%s172 + $0x18] sm:$0xf]
      %v190 = vld [vmem:[%s172 + $0x1c] sm:$0xf]
      %v191 = vld [vmem:[%s172 + $0x20] sm:$0x1]
      %v192 = vld [vmem:[%s172 + $0x24] sm:$0xf]
      %v193 = vld [vmem:[%s172 + $0x28] sm:$0xf]
      %v194 = vld [vmem:[%s172 + $0x2c] sm:$0x1]
      %v195 = vld [vmem:[%s172 + $0x30] sm:$0xf]
      %v196 = vld [vmem:[%s172 + $0x34] sm:$0xf]
      %v197 = vld [vmem:[%s172 + $0x38] sm:$0x1]
      %v198 = vld [vmem:[%s172 + $0x3c] sm:$0xf]
      %v199 = vld [vmem:[%s172 + $0x40] sm:$0xf]
      %v200 = vld [vmem:[%s172 + $0x44] sm:$0x1]
      %v201 = vld [vmem:[%s172 + $0x48] sm:$0xf]
      %v202 = vld [vmem:[%s172 + $0x4c] sm:$0xf]
      %v203 = vld [vmem:[%s172 + $0x50] sm:$0x1]
      %v204 = vld [vmem:[%s172 + $0x54] sm:$0xf]
      %v205 = vld [vmem:[%s172 + $0x58] sm:$0xf]
      %v206 = vld [vmem:[%s172 + $0x5c] sm:$0x1]
      %v207 = vld [vmem:[%s172 + $0x60] sm:$0xf]
      %v208 = vld [vmem:[%s172 + $0x64] sm:$0xf]
      %v209 = vld [vmem:[%s172 + $0x68] sm:$0x1]
      %v210 = vld [vmem:[%s172 + $0x6c] sm:$0xf]
      %v211 = vld [vmem:[%s172 + $0x70] sm:$0xf]
      %v212 = vld [vmem:[%s172 + $0x74] sm:$0x1]
      %v213 = vld [vmem:[%s172 + $0x78] sm:$0xf]
      %v214 = vld [vmem:[%s172 + $0x7c] sm:$0xf]
      %v215 = vld [vmem:[%s172 + $0x80] sm:$0x1]
      %v216 = vld [vmem:[%s172 + $0x84] sm:$0xf]
      %v217 = vld [vmem:[%s172 + $0x88] sm:$0xf]
      %v218 = vld [vmem:[%s172 + $0x8c] sm:$0x1]
      %v219 = vld [vmem:[%s172 + $0x90] sm:$0xf]
      %v220 = vld [vmem:[%s172 + $0x94] sm:$0xf]
      %v221 = vld [vmem:[%s172 + $0x98] sm:$0x1]
      %v222 = vld [vmem:[%s172 + $0x9c] sm:$0xf]
      %v223 = vld [vmem:[%s172 + $0xa0] sm:$0xf]
      %v224 = vld [vmem:[%s172 + $0xa4] sm:$0x1]
      %v225 = vld [vmem:[%s172 + $0xa8] sm:$0xf]
      %v226 = vld [vmem:[%s172 + $0xac] sm:$0xf]
      %v227 = vld [vmem:[%s172 + $0xb0] sm:$0x1]
      %v228 = vld [vmem:[%s172 + $0xb4] sm:$0xf]
      %v229 = vld [vmem:[%s172 + $0xb8] sm:$0xf]
      %v230 = vld [vmem:[%s172 + $0xbc] sm:$0x1]
      %v231 = vld [vmem:[%s172 + $0xc0] sm:$0xf]
      %v232 = vld [vmem:[%s172 + $0xc4] sm:$0xf]
      %v233 = vld [vmem:[%s172 + $0xc8] sm:$0x1]
      %v234 = vld [vmem:[%s172 + $0xcc] sm:$0xf]
      %v235 = vld [vmem:[%s172 + $0xd0] sm:$0xf]
      %v236 = vld [vmem:[%s172 + $0xd4] sm:$0x1]
      %v269 = vunpack.c.l.b16 %v183
      %v270 = vunpack.c.l.b16 %v184
      %v271 = vunpack.c.l.b16 %v186
      %v272 = vunpack.c.l.b16 %v187
      %v273 = vunpack.c.l.b16 %v189
      %v274 = vunpack.c.l.b16 %v190
      %v275 = vunpack.c.l.b16 %v192
      %v276 = vunpack.c.l.b16 %v193
      %v277 = vunpack.c.l.b16 %v195
      %v278 = vunpack.c.l.b16 %v196
      %v279 = vunpack.c.l.b16 %v198
      %v280 = vunpack.c.l.b16 %v199
      %v281 = vunpack.c.l.b16 %v201
      %v282 = vunpack.c.l.b16 %v202
      %v283 = vunpack.c.l.b16 %v204
      %v284 = vunpack.c.l.b16 %v205
      %v285 = vunpack.c.l.b16 %v207
      %v286 = vunpack.c.l.b16 %v208
      %v287 = vunpack.c.l.b16 %v210
      %v288 = vunpack.c.l.b16 %v211
      %v289 = vunpack.c.l.b16 %v213
      %v290 = vunpack.c.l.b16 %v214
      %v291 = vunpack.c.l.b16 %v216
      %v292 = vunpack.c.l.b16 %v217
      %v293 = vunpack.c.l.b16 %v219
      %v294 = vunpack.c.l.b16 %v220
      %v295 = vunpack.c.l.b16 %v222
      %v296 = vunpack.c.l.b16 %v223
      %v297 = vunpack.c.l.b16 %v225
      %v298 = vunpack.c.l.b16 %v226
      %v299 = vunpack.c.l.b16 %v228
      %v300 = vunpack.c.l.b16 %v229
      %v301 = vpack.c.b16 %v270, %v269
      %v302 = vpack.c.b16 %v272, %v271
      %v303 = vpack.c.b16 %v274, %v273
      %v304 = vpack.c.b16 %v276, %v275
      %v305 = vpack.c.b16 %v278, %v277
      %v306 = vpack.c.b16 %v280, %v279
      %v307 = vpack.c.b16 %v282, %v281
      %v308 = vpack.c.b16 %v284, %v283
      %v309 = vpack.c.b16 %v286, %v285
      %v310 = vpack.c.b16 %v288, %v287
      %v311 = vpack.c.b16 %v290, %v289
      %v312 = vpack.c.b16 %v292, %v291
      %v313 = vpack.c.b16 %v294, %v293
      %v314 = vpack.c.b16 %v296, %v295
      %v315 = vpack.c.b16 %v298, %v297
      %v316 = vpack.c.b16 %v300, %v299
      %v333 = vunpack.c.l.b16 %v185
      %v334 = vunpack.c.l.b16 %v188
      %v335 = vunpack.c.l.b16 %v191
      %v336 = vunpack.c.l.b16 %v194
      %v337 = vunpack.c.l.b16 %v197
      %v338 = vunpack.c.l.b16 %v200
      %v339 = vunpack.c.l.b16 %v203
      %v340 = vunpack.c.l.b16 %v206
      %v341 = vunpack.c.l.b16 %v209
      %v342 = vunpack.c.l.b16 %v212
      %v343 = vunpack.c.l.b16 %v215
      %v344 = vunpack.c.l.b16 %v218
      %v345 = vunpack.c.l.b16 %v221
      %v346 = vunpack.c.l.b16 %v224
      %v347 = vunpack.c.l.b16 %v227
      %v348 = vunpack.c.l.b16 %v230
      %v349 = vpack.c.b16 %v333, %v333
      %v350 = vpack.c.b16 %v334, %v334
      %v351 = vpack.c.b16 %v335, %v335
      %v352 = vpack.c.b16 %v336, %v336
      %v353 = vpack.c.b16 %v337, %v337
      %v354 = vpack.c.b16 %v338, %v338
      %v355 = vpack.c.b16 %v339, %v339
      %v356 = vpack.c.b16 %v340, %v340
      %v357 = vpack.c.b16 %v341, %v341
      %v358 = vpack.c.b16 %v342, %v342
      %v359 = vpack.c.b16 %v343, %v343
      %v360 = vpack.c.b16 %v344, %v344
      %v361 = vpack.c.b16 %v345, %v345
      %v362 = vpack.c.b16 %v346, %v346
      %v363 = vpack.c.b16 %v347, %v347
      %v364 = vpack.c.b16 %v348, %v348
      %vm365 = vsmask.f32 7424
      %v367 = vshrl.u32 %v301, 16
      %v369 = vshll.u32 %v301, 16
      %v371 = vrot.slane %v369, 1
      %v372 = vor.u32 %v367, %v371
      %v374 = vshll.u32 %v349, 16
      %v376 = vrot.slane %v374, 1
      %v377 = vsel %vm365, %v372, %v376
      %v379 = vshrl.u32 %v302, 16
      %v381 = vshll.u32 %v302, 16
      %v383 = vrot.slane %v381, 1
      %v384 = vor.u32 %v379, %v383
      %v386 = vshll.u32 %v350, 16
      %v388 = vrot.slane %v386, 1
      %v389 = vsel %vm365, %v384, %v388
      %v391 = vshrl.u32 %v303, 16
      %v393 = vshll.u32 %v303, 16
      %v395 = vrot.slane %v393, 1
      %v396 = vor.u32 %v391, %v395
      %v398 = vshll.u32 %v351, 16
      %v400 = vrot.slane %v398, 1
      %v401 = vsel %vm365, %v396, %v400
      %v403 = vshrl.u32 %v304, 16
      %v405 = vshll.u32 %v304, 16
      %v407 = vrot.slane %v405, 1
      %v408 = vor.u32 %v403, %v407
      %v410 = vshll.u32 %v352, 16
      %v412 = vrot.slane %v410, 1
      %v413 = vsel %vm365, %v408, %v412
      %v415 = vshrl.u32 %v305, 16
      %v417 = vshll.u32 %v305, 16
      %v419 = vrot.slane %v417, 1
      %v420 = vor.u32 %v415, %v419
      %v422 = vshll.u32 %v353, 16
      %v424 = vrot.slane %v422, 1
      %v425 = vsel %vm365, %v420, %v424
      %v427 = vshrl.u32 %v306, 16
      %v429 = vshll.u32 %v306, 16
      %v431 = vrot.slane %v429, 1
      %v432 = vor.u32 %v427, %v431
      %v434 = vshll.u32 %v354, 16
      %v436 = vrot.slane %v434, 1
      %v437 = vsel %vm365, %v432, %v436
      %v439 = vshrl.u32 %v307, 16
      %v441 = vshll.u32 %v307, 16
      %v443 = vrot.slane %v441, 1
      %v444 = vor.u32 %v439, %v443
      %v446 = vshll.u32 %v355, 16
      %v448 = vrot.slane %v446, 1
      %v449 = vsel %vm365, %v444, %v448
      %v451 = vshrl.u32 %v308, 16
      %v453 = vshll.u32 %v308, 16
      %v455 = vrot.slane %v453, 1
      %v456 = vor.u32 %v451, %v455
      %v458 = vshll.u32 %v356, 16
      %v460 = vrot.slane %v458, 1
      %v461 = vsel %vm365, %v456, %v460
      %v463 = vshrl.u32 %v309, 16
      %v465 = vshll.u32 %v309, 16
      %v467 = vrot.slane %v465, 1
      %v468 = vor.u32 %v463, %v467
      %v470 = vshll.u32 %v357, 16
      %v472 = vrot.slane %v470, 1
      %v473 = vsel %vm365, %v468, %v472
      %v475 = vshrl.u32 %v310, 16
      %v477 = vshll.u32 %v310, 16
      %v479 = vrot.slane %v477, 1
      %v480 = vor.u32 %v475, %v479
      %v482 = vshll.u32 %v358, 16
      %v484 = vrot.slane %v482, 1
      %v485 = vsel %vm365, %v480, %v484
      %v487 = vshrl.u32 %v311, 16
      %v489 = vshll.u32 %v311, 16
      %v491 = vrot.slane %v489, 1
      %v492 = vor.u32 %v487, %v491
      %v494 = vshll.u32 %v359, 16
      %v496 = vrot.slane %v494, 1
      %v497 = vsel %vm365, %v492, %v496
      %v499 = vshrl.u32 %v312, 16
      %v501 = vshll.u32 %v312, 16
      %v503 = vrot.slane %v501, 1
      %v504 = vor.u32 %v499, %v503
      %v506 = vshll.u32 %v360, 16
      %v508 = vrot.slane %v506, 1
      %v509 = vsel %vm365, %v504, %v508
      %v511 = vshrl.u32 %v313, 16
      %v513 = vshll.u32 %v313, 16
      %v515 = vrot.slane %v513, 1
      %v516 = vor.u32 %v511, %v515
      %v518 = vshll.u32 %v361, 16
      %v520 = vrot.slane %v518, 1
      %v521 = vsel %vm365, %v516, %v520
      %v523 = vshrl.u32 %v314, 16
      %v525 = vshll.u32 %v314, 16
      %v527 = vrot.slane %v525, 1
      %v528 = vor.u32 %v523, %v527
      %v530 = vshll.u32 %v362, 16
      %v532 = vrot.slane %v530, 1
      %v533 = vsel %vm365, %v528, %v532
      %v535 = vshrl.u32 %v315, 16
      %v537 = vshll.u32 %v315, 16
      %v539 = vrot.slane %v537, 1
      %v540 = vor.u32 %v535, %v539
      %v542 = vshll.u32 %v363, 16
      %v544 = vrot.slane %v542, 1
      %v545 = vsel %vm365, %v540, %v544
      %v547 = vshrl.u32 %v316, 16
      %v549 = vshll.u32 %v316, 16
      %v551 = vrot.slane %v549, 1
      %v552 = vor.u32 %v547, %v551
      %v554 = vshll.u32 %v364, 16
      %v556 = vrot.slane %v554, 1
      %v557 = vsel %vm365, %v552, %v556
      %558 = vrot.lane.b32.xlu0 %v377, 4
      %v559 = vpop.permute.xlu0 %558
      %560 = vrot.lane.b32.xlu0 %v389, 4
      %v561 = vpop.permute.xlu0 %560
      %562 = vrot.lane.b32.xlu0 %v401, 4
      %v563 = vpop.permute.xlu0 %562
      %564 = vrot.lane.b32.xlu0 %v413, 4
      %v565 = vpop.permute.xlu0 %564
      %566 = vrot.lane.b32.xlu0 %v425, 4
      %v567 = vpop.permute.xlu0 %566
      %568 = vrot.lane.b32.xlu0 %v437, 4
      %v569 = vpop.permute.xlu0 %568
      %570 = vrot.lane.b32.xlu0 %v449, 4
      %v571 = vpop.permute.xlu0 %570
      %572 = vrot.lane.b32.xlu0 %v461, 4
      %v573 = vpop.permute.xlu0 %572
      %574 = vrot.lane.b32.xlu0 %v473, 4
      %v575 = vpop.permute.xlu0 %574
      %576 = vrot.lane.b32.xlu0 %v485, 4
      %v577 = vpop.permute.xlu0 %576
      %578 = vrot.lane.b32.xlu0 %v497, 4
      %v579 = vpop.permute.xlu0 %578
      %580 = vrot.lane.b32.xlu0 %v509, 4
      %v581 = vpop.permute.xlu0 %580
      %582 = vrot.lane.b32.xlu0 %v521, 4
      %v583 = vpop.permute.xlu0 %582
      %584 = vrot.lane.b32.xlu0 %v533, 4
      %v585 = vpop.permute.xlu0 %584
      %586 = vrot.lane.b32.xlu0 %v545, 4
      %v587 = vpop.permute.xlu0 %586
      %588 = vrot.lane.b32.xlu0 %v557, 4
      %v589 = vpop.permute.xlu0 %588
      %vm590 = vcmask 1046528
      %v591 = vrot.slane %v301, 1
      %v592 = vrot.slane %v349, 1
      %v593 = vsel %vm590, %v591, %v592
      %v594 = vrot.slane %v302, 1
      %v595 = vrot.slane %v350, 1
      %v596 = vsel %vm590, %v594, %v595
      %v597 = vrot.slane %v303, 1
      %v598 = vrot.slane %v351, 1
      %v599 = vsel %vm590, %v597, %v598
      %v600 = vrot.slane %v304, 1
      %v601 = vrot.slane %v352, 1
      %v602 = vsel %vm590, %v600, %v601
      %v603 = vrot.slane %v305, 1
      %v604 = vrot.slane %v353, 1
      %v605 = vsel %vm590, %v603, %v604
      %v606 = vrot.slane %v306, 1
      %v607 = vrot.slane %v354, 1
      %v608 = vsel %vm590, %v606, %v607
      %v609 = vrot.slane %v307, 1
      %v610 = vrot.slane %v355, 1
      %v611 = vsel %vm590, %v609, %v610
      %v612 = vrot.slane %v308, 1
      %v613 = vrot.slane %v356, 1
      %v614 = vsel %vm590, %v612, %v613
      %v615 = vrot.slane %v309, 1
      %v616 = vrot.slane %v357, 1
      %v617 = vsel %vm590, %v615, %v616
      %v618 = vrot.slane %v310, 1
      %v619 = vrot.slane %v358, 1
      %v620 = vsel %vm590, %v618, %v619
      %v621 = vrot.slane %v311, 1
      %v622 = vrot.slane %v359, 1
      %v623 = vsel %vm590, %v621, %v622
      %v624 = vrot.slane %v312, 1
      %v625 = vrot.slane %v360, 1
      %v626 = vsel %vm590, %v624, %v625
      %v627 = vrot.slane %v313, 1
      %v628 = vrot.slane %v361, 1
      %v629 = vsel %vm590, %v627, %v628
      %v630 = vrot.slane %v314, 1
      %v631 = vrot.slane %v362, 1
      %v632 = vsel %vm590, %v630, %v631
      %v633 = vrot.slane %v315, 1
      %v634 = vrot.slane %v363, 1
      %v635 = vsel %vm590, %v633, %v634
      %v636 = vrot.slane %v316, 1
      %v637 = vrot.slane %v364, 1
      %v638 = vsel %vm590, %v636, %v637
      %639 = vrot.lane.b32.xlu0 %v593, 8
      %v640 = vpop.permute.xlu0 %639
      %641 = vrot.lane.b32.xlu0 %v596, 8
      %v642 = vpop.permute.xlu0 %641
      %643 = vrot.lane.b32.xlu0 %v599, 8
      %v644 = vpop.permute.xlu0 %643
      %645 = vrot.lane.b32.xlu0 %v602, 8
      %v646 = vpop.permute.xlu0 %645
      %647 = vrot.lane.b32.xlu0 %v605, 8
      %v648 = vpop.permute.xlu0 %647
      %649 = vrot.lane.b32.xlu0 %v608, 8
      %v650 = vpop.permute.xlu0 %649
      %651 = vrot.lane.b32.xlu0 %v611, 8
      %v652 = vpop.permute.xlu0 %651
      %653 = vrot.lane.b32.xlu0 %v614, 8
      %v654 = vpop.permute.xlu0 %653
      %655 = vrot.lane.b32.xlu0 %v617, 8
      %v656 = vpop.permute.xlu0 %655
      %657 = vrot.lane.b32.xlu0 %v620, 8
      %v658 = vpop.permute.xlu0 %657
      %659 = vrot.lane.b32.xlu0 %v623, 8
      %v660 = vpop.permute.xlu0 %659
      %661 = vrot.lane.b32.xlu0 %v626, 8
      %v662 = vpop.permute.xlu0 %661
      %663 = vrot.lane.b32.xlu0 %v629, 8
      %v664 = vpop.permute.xlu0 %663
      %665 = vrot.lane.b32.xlu0 %v632, 8
      %v666 = vpop.permute.xlu0 %665
      %667 = vrot.lane.b32.xlu0 %v635, 8
      %v668 = vpop.permute.xlu0 %667
      %669 = vrot.lane.b32.xlu0 %v638, 8
      %v670 = vpop.permute.xlu0 %669
      %v673 = vunpack.c.l.b16 %v231
      %v674 = vunpack.c.l.b16 %v232
      %v675 = vpack.c.b16 %v674, %v673
      %676 = vrot.lane.b32.xlu0 %v302, 12
      %v677 = vpop.permute.xlu0 %676
      %678 = vrot.lane.b32.xlu0 %v303, 12
      %v679 = vpop.permute.xlu0 %678
      %680 = vrot.lane.b32.xlu0 %v304, 12
      %v681 = vpop.permute.xlu0 %680
      %682 = vrot.lane.b32.xlu0 %v305, 12
      %v683 = vpop.permute.xlu0 %682
      %684 = vrot.lane.b32.xlu0 %v306, 12
      %v685 = vpop.permute.xlu0 %684
      %686 = vrot.lane.b32.xlu0 %v307, 12
      %v687 = vpop.permute.xlu0 %686
      %688 = vrot.lane.b32.xlu0 %v308, 12
      %v689 = vpop.permute.xlu0 %688
      %690 = vrot.lane.b32.xlu0 %v309, 12
      %v691 = vpop.permute.xlu0 %690
      %692 = vrot.lane.b32.xlu0 %v310, 12
      %v693 = vpop.permute.xlu0 %692
      %694 = vrot.lane.b32.xlu0 %v311, 12
      %v695 = vpop.permute.xlu0 %694
      %696 = vrot.lane.b32.xlu0 %v312, 12
      %v697 = vpop.permute.xlu0 %696
      %698 = vrot.lane.b32.xlu0 %v313, 12
      %v699 = vpop.permute.xlu0 %698
      %700 = vrot.lane.b32.xlu0 %v314, 12
      %v701 = vpop.permute.xlu0 %700
      %702 = vrot.lane.b32.xlu0 %v315, 12
      %v703 = vpop.permute.xlu0 %702
      %704 = vrot.lane.b32.xlu0 %v316, 12
      %v705 = vpop.permute.xlu0 %704
      %706 = vrot.lane.b32.xlu0 %v675, 12
      %v707 = vpop.permute.xlu0 %706
      %v709 = vunpack.c.l.b16 %v233
      %v710 = vpack.c.b16 %v709, %v709
      %v712 = vshrl.u32 %v675, 16
      %v714 = vshll.u32 %v675, 16
      %v716 = vrot.slane %v714, 1
      %v717 = vor.u32 %v712, %v716
      %v719 = vshll.u32 %v710, 16
      %v721 = vrot.slane %v719, 1
      %v722 = vsel %vm365, %v717, %v721
      %723 = vrot.lane.b32.xlu0 %v389, 16
      %v724 = vpop.permute.xlu0 %723
      %725 = vrot.lane.b32.xlu0 %v401, 16
      %v726 = vpop.permute.xlu0 %725
      %727 = vrot.lane.b32.xlu0 %v413, 16
      %v728 = vpop.permute.xlu0 %727
      %729 = vrot.lane.b32.xlu0 %v425, 16
      %v730 = vpop.permute.xlu0 %729
      %731 = vrot.lane.b32.xlu0 %v437, 16
      %v732 = vpop.permute.xlu0 %731
      %733 = vrot.lane.b32.xlu0 %v449, 16
      %v734 = vpop.permute.xlu0 %733
      %735 = vrot.lane.b32.xlu0 %v461, 16
      %v736 = vpop.permute.xlu0 %735
      %737 = vrot.lane.b32.xlu0 %v473, 16
      %v738 = vpop.permute.xlu0 %737
      %739 = vrot.lane.b32.xlu0 %v485, 16
      %v740 = vpop.permute.xlu0 %739
      %741 = vrot.lane.b32.xlu0 %v497, 16
      %v742 = vpop.permute.xlu0 %741
      %743 = vrot.lane.b32.xlu0 %v509, 16
      %v744 = vpop.permute.xlu0 %743
      %745 = vrot.lane.b32.xlu0 %v521, 16
      %v746 = vpop.permute.xlu0 %745
      %747 = vrot.lane.b32.xlu0 %v533, 16
      %v748 = vpop.permute.xlu0 %747
      %749 = vrot.lane.b32.xlu0 %v545, 16
      %v750 = vpop.permute.xlu0 %749
      %751 = vrot.lane.b32.xlu0 %v557, 16
      %v752 = vpop.permute.xlu0 %751
      %753 = vrot.lane.b32.xlu0 %v722, 16
      %v754 = vpop.permute.xlu0 %753
      %v755 = vrot.slane %v675, 1
      %v756 = vrot.slane %v710, 1
      %v757 = vsel %vm590, %v755, %v756
      %758 = vrot.lane.b32.xlu0 %v596, 20
      %v759 = vpop.permute.xlu0 %758
      %760 = vrot.lane.b32.xlu0 %v599, 20
      %v761 = vpop.permute.xlu0 %760
      %762 = vrot.lane.b32.xlu0 %v602, 20
      %v763 = vpop.permute.xlu0 %762
      %764 = vrot.lane.b32.xlu0 %v605, 20
      %v765 = vpop.permute.xlu0 %764
      %766 = vrot.lane.b32.xlu0 %v608, 20
      %v767 = vpop.permute.xlu0 %766
      %768 = vrot.lane.b32.xlu0 %v611, 20
      %v769 = vpop.permute.xlu0 %768
      %770 = vrot.lane.b32.xlu0 %v614, 20
      %v771 = vpop.permute.xlu0 %770
      %772 = vrot.lane.b32.xlu0 %v617, 20
      %v773 = vpop.permute.xlu0 %772
      %774 = vrot.lane.b32.xlu0 %v620, 20
      %v775 = vpop.permute.xlu0 %774
      %776 = vrot.lane.b32.xlu0 %v623, 20
      %v777 = vpop.permute.xlu0 %776
      %778 = vrot.lane.b32.xlu0 %v626, 20
      %v779 = vpop.permute.xlu0 %778
      %780 = vrot.lane.b32.xlu0 %v629, 20
      %v781 = vpop.permute.xlu0 %780
      %782 = vrot.lane.b32.xlu0 %v632, 20
      %v783 = vpop.permute.xlu0 %782
      %784 = vrot.lane.b32.xlu0 %v635, 20
      %v785 = vpop.permute.xlu0 %784
      %786 = vrot.lane.b32.xlu0 %v638, 20
      %v787 = vpop.permute.xlu0 %786
      %788 = vrot.lane.b32.xlu0 %v757, 20
      %v789 = vpop.permute.xlu0 %788
      %v792 = vunpack.c.l.b16 %v234
      %v793 = vunpack.c.l.b16 %v235
      %v794 = vpack.c.b16 %v793, %v792
      %795 = vrot.lane.b32.xlu0 %v303, 24
      %v796 = vpop.permute.xlu0 %795
      %797 = vrot.lane.b32.xlu0 %v304, 24
      %v798 = vpop.permute.xlu0 %797
      %799 = vrot.lane.b32.xlu0 %v305, 24
      %v800 = vpop.permute.xlu0 %799
      %801 = vrot.lane.b32.xlu0 %v306, 24
      %v802 = vpop.permute.xlu0 %801
      %803 = vrot.lane.b32.xlu0 %v307, 24
      %v804 = vpop.permute.xlu0 %803
      %805 = vrot.lane.b32.xlu0 %v308, 24
      %v806 = vpop.permute.xlu0 %805
      %807 = vrot.lane.b32.xlu0 %v309, 24
      %v808 = vpop.permute.xlu0 %807
      %809 = vrot.lane.b32.xlu0 %v310, 24
      %v810 = vpop.permute.xlu0 %809
      %811 = vrot.lane.b32.xlu0 %v311, 24
      %v812 = vpop.permute.xlu0 %811
      %813 = vrot.lane.b32.xlu0 %v312, 24
      %v814 = vpop.permute.xlu0 %813
      %815 = vrot.lane.b32.xlu0 %v313, 24
      %v816 = vpop.permute.xlu0 %815
      %817 = vrot.lane.b32.xlu0 %v314, 24
      %v818 = vpop.permute.xlu0 %817
      %819 = vrot.lane.b32.xlu0 %v315, 24
      %v820 = vpop.permute.xlu0 %819
      %821 = vrot.lane.b32.xlu0 %v316, 24
      %v822 = vpop.permute.xlu0 %821
      %823 = vrot.lane.b32.xlu0 %v675, 24
      %v824 = vpop.permute.xlu0 %823
      %825 = vrot.lane.b32.xlu0 %v794, 24
      %v826 = vpop.permute.xlu0 %825
      %v828 = vunpack.c.l.b16 %v236
      %v829 = vpack.c.b16 %v828, %v828
      %v831 = vshrl.u32 %v794, 16
      %v833 = vshll.u32 %v794, 16
      %v835 = vrot.slane %v833, 1
      %v836 = vor.u32 %v831, %v835
      %v838 = vshll.u32 %v829, 16
      %v840 = vrot.slane %v838, 1
      %v841 = vsel %vm365, %v836, %v840
      %842 = vrot.lane.b32.xlu0 %v401, 28
      %v843 = vpop.permute.xlu0 %842
      %844 = vrot.lane.b32.xlu0 %v413, 28
      %v845 = vpop.permute.xlu0 %844
      %846 = vrot.lane.b32.xlu0 %v425, 28
      %v847 = vpop.permute.xlu0 %846
      %848 = vrot.lane.b32.xlu0 %v437, 28
      %v849 = vpop.permute.xlu0 %848
      %850 = vrot.lane.b32.xlu0 %v449, 28
      %v851 = vpop.permute.xlu0 %850
      %852 = vrot.lane.b32.xlu0 %v461, 28
      %v853 = vpop.permute.xlu0 %852
      %854 = vrot.lane.b32.xlu0 %v473, 28
      %v855 = vpop.permute.xlu0 %854
      %856 = vrot.lane.b32.xlu0 %v485, 28
      %v857 = vpop.permute.xlu0 %856
      %858 = vrot.lane.b32.xlu0 %v497, 28
      %v859 = vpop.permute.xlu0 %858
      %860 = vrot.lane.b32.xlu0 %v509, 28
      %v861 = vpop.permute.xlu0 %860
      %862 = vrot.lane.b32.xlu0 %v521, 28
      %v863 = vpop.permute.xlu0 %862
      %864 = vrot.lane.b32.xlu0 %v533, 28
      %v865 = vpop.permute.xlu0 %864
      %866 = vrot.lane.b32.xlu0 %v545, 28
      %v867 = vpop.permute.xlu0 %866
      %868 = vrot.lane.b32.xlu0 %v557, 28
      %v869 = vpop.permute.xlu0 %868
      %870 = vrot.lane.b32.xlu0 %v722, 28
      %v871 = vpop.permute.xlu0 %870
      %872 = vrot.lane.b32.xlu0 %v841, 28
      %v873 = vpop.permute.xlu0 %872
      %v874 = vrot.slane %v794, 1
      %v875 = vrot.slane %v829, 1
      %v876 = vsel %vm590, %v874, %v875
      %877 = vrot.lane.b32.xlu0 %v599, 32
      %v878 = vpop.permute.xlu0 %877
      %879 = vrot.lane.b32.xlu0 %v602, 32
      %v880 = vpop.permute.xlu0 %879
      %881 = vrot.lane.b32.xlu0 %v605, 32
      %v882 = vpop.permute.xlu0 %881
      %883 = vrot.lane.b32.xlu0 %v608, 32
      %v884 = vpop.permute.xlu0 %883
      %885 = vrot.lane.b32.xlu0 %v611, 32
      %v886 = vpop.permute.xlu0 %885
      %887 = vrot.lane.b32.xlu0 %v614, 32
      %v888 = vpop.permute.xlu0 %887
      %889 = vrot.lane.b32.xlu0 %v617, 32
      %v890 = vpop.permute.xlu0 %889
      %891 = vrot.lane.b32.xlu0 %v620, 32
      %v892 = vpop.permute.xlu0 %891
      %893 = vrot.lane.b32.xlu0 %v623, 32
      %v894 = vpop.permute.xlu0 %893
      %895 = vrot.lane.b32.xlu0 %v626, 32
      %v896 = vpop.permute.xlu0 %895
      %897 = vrot.lane.b32.xlu0 %v629, 32
      %v898 = vpop.permute.xlu0 %897
      %899 = vrot.lane.b32.xlu0 %v632, 32
      %v900 = vpop.permute.xlu0 %899
      %901 = vrot.lane.b32.xlu0 %v635, 32
      %v902 = vpop.permute.xlu0 %901
      %903 = vrot.lane.b32.xlu0 %v638, 32
      %v904 = vpop.permute.xlu0 %903
      %905 = vrot.lane.b32.xlu0 %v757, 32
      %v906 = vpop.permute.xlu0 %905
      %907 = vrot.lane.b32.xlu0 %v876, 32
      %v908 = vpop.permute.xlu0 %907
      %vm909 = vcmask 31744
      %v911 = vsel %vm909, %v301, %v559
      %v913 = vsel %vm909, %v302, %v561
      %v915 = vsel %vm909, %v303, %v563
      %v917 = vsel %vm909, %v304, %v565
      %v919 = vsel %vm909, %v305, %v567
      %v921 = vsel %vm909, %v306, %v569
      %v923 = vsel %vm909, %v307, %v571
      %v925 = vsel %vm909, %v308, %v573
      %v927 = vsel %vm909, %v309, %v575
      %v929 = vsel %vm909, %v310, %v577
      %v931 = vsel %vm909, %v311, %v579
      %v933 = vsel %vm909, %v312, %v581
      %v935 = vsel %vm909, %v313, %v583
      %v937 = vsel %vm909, %v314, %v585
      %v939 = vsel %vm909, %v315, %v587
      %v941 = vsel %vm909, %v316, %v589
      %vm942 = vcmask 64512
      %v944 = vsel %vm942, %v911, %v640
      %v946 = vsel %vm942, %v913, %v642
      %v948 = vsel %vm942, %v915, %v644
      %v950 = vsel %vm942, %v917, %v646
      %v952 = vsel %vm942, %v919, %v648
      %v954 = vsel %vm942, %v921, %v650
      %v956 = vsel %vm942, %v923, %v652
      %v958 = vsel %vm942, %v925, %v654
      %v960 = vsel %vm942, %v927, %v656
      %v962 = vsel %vm942, %v929, %v658
      %v964 = vsel %vm942, %v931, %v660
      %v966 = vsel %vm942, %v933, %v662
      %v968 = vsel %vm942, %v935, %v664
      %v970 = vsel %vm942, %v937, %v666
      %v972 = vsel %vm942, %v939, %v668
      %v974 = vsel %vm942, %v941, %v670
      %vm975 = vcmask 97280
      %v977 = vsel %vm975, %v944, %v677
      %v979 = vsel %vm975, %v946, %v679
      %v981 = vsel %vm975, %v948, %v681
      %v983 = vsel %vm975, %v950, %v683
      %v985 = vsel %vm975, %v952, %v685
      %v987 = vsel %vm975, %v954, %v687
      %v989 = vsel %vm975, %v956, %v689
      %v991 = vsel %vm975, %v958, %v691
      %v993 = vsel %vm975, %v960, %v693
      %v995 = vsel %vm975, %v962, %v695
      %v997 = vsel %vm975, %v964, %v697
      %v999 = vsel %vm975, %v966, %v699
      %v1001 = vsel %vm975, %v968, %v701
      %v1003 = vsel %vm975, %v970, %v703
      %v1005 = vsel %vm975, %v972, %v705
      %v1007 = vsel %vm975, %v974, %v707
      %vm1008 = vcmask 130048
      %v1010 = vsel %vm1008, %v977, %v724
      %v1012 = vsel %vm1008, %v979, %v726
      %v1014 = vsel %vm1008, %v981, %v728
      %v1016 = vsel %vm1008, %v983, %v730
      %v1018 = vsel %vm1008, %v985, %v732
      %v1020 = vsel %vm1008, %v987, %v734
      %v1022 = vsel %vm1008, %v989, %v736
      %v1024 = vsel %vm1008, %v991, %v738
      %v1026 = vsel %vm1008, %v993, %v740
      %v1028 = vsel %vm1008, %v995, %v742
      %v1030 = vsel %vm1008, %v997, %v744
      %v1032 = vsel %vm1008, %v999, %v746
      %v1034 = vsel %vm1008, %v1001, %v748
      %v1036 = vsel %vm1008, %v1003, %v750
      %v1038 = vsel %vm1008, %v1005, %v752
      %v1040 = vsel %vm1008, %v1007, %v754
      %vm1041 = vcmask 162816
      %v1043 = vsel %vm1041, %v1010, %v759
      %v1045 = vsel %vm1041, %v1012, %v761
      %v1047 = vsel %vm1041, %v1014, %v763
      %v1049 = vsel %vm1041, %v1016, %v765
      %v1051 = vsel %vm1041, %v1018, %v767
      %v1053 = vsel %vm1041, %v1020, %v769
      %v1055 = vsel %vm1041, %v1022, %v771
      %v1057 = vsel %vm1041, %v1024, %v773
      %v1059 = vsel %vm1041, %v1026, %v775
      %v1061 = vsel %vm1041, %v1028, %v777
      %v1063 = vsel %vm1041, %v1030, %v779
      %v1065 = vsel %vm1041, %v1032, %v781
      %v1067 = vsel %vm1041, %v1034, %v783
      %v1069 = vsel %vm1041, %v1036, %v785
      %v1071 = vsel %vm1041, %v1038, %v787
      %v1073 = vsel %vm1041, %v1040, %v789
      %vm1074 = vcmask 195584
      %v1076 = vsel %vm1074, %v1043, %v796
      %v1078 = vsel %vm1074, %v1045, %v798
      %v1080 = vsel %vm1074, %v1047, %v800
      %v1082 = vsel %vm1074, %v1049, %v802
      %v1084 = vsel %vm1074, %v1051, %v804
      %v1086 = vsel %vm1074, %v1053, %v806
      %v1088 = vsel %vm1074, %v1055, %v808
      %v1090 = vsel %vm1074, %v1057, %v810
      %v1092 = vsel %vm1074, %v1059, %v812
      %v1094 = vsel %vm1074, %v1061, %v814
      %v1096 = vsel %vm1074, %v1063, %v816
      %v1098 = vsel %vm1074, %v1065, %v818
      %v1100 = vsel %vm1074, %v1067, %v820
      %v1102 = vsel %vm1074, %v1069, %v822
      %v1104 = vsel %vm1074, %v1071, %v824
      %v1106 = vsel %vm1074, %v1073, %v826
      %vm1107 = vcmask 228352
      %v1109 = vsel %vm1107, %v1076, %v843
      %v1111 = vsel %vm1107, %v1078, %v845
      %v1113 = vsel %vm1107, %v1080, %v847
      %v1115 = vsel %vm1107, %v1082, %v849
      %v1117 = vsel %vm1107, %v1084, %v851
      %v1119 = vsel %vm1107, %v1086, %v853
      %v1121 = vsel %vm1107, %v1088, %v855
      %v1123 = vsel %vm1107, %v1090, %v857
      %v1125 = vsel %vm1107, %v1092, %v859
      %v1127 = vsel %vm1107, %v1094, %v861
      %v1129 = vsel %vm1107, %v1096, %v863
      %v1131 = vsel %vm1107, %v1098, %v865
      %v1133 = vsel %vm1107, %v1100, %v867
      %v1135 = vsel %vm1107, %v1102, %v869
      %v1137 = vsel %vm1107, %v1104, %v871
      %v1139 = vsel %vm1107, %v1106, %v873
      %vm1140 = vcmask 261120
      %v1142 = vsel %vm1140, %v1109, %v878
      %v1144 = vsel %vm1140, %v1111, %v880
      %v1146 = vsel %vm1140, %v1113, %v882
      %v1148 = vsel %vm1140, %v1115, %v884
      %v1150 = vsel %vm1140, %v1117, %v886
      %v1152 = vsel %vm1140, %v1119, %v888
      %v1154 = vsel %vm1140, %v1121, %v890
      %v1156 = vsel %vm1140, %v1123, %v892
      %v1158 = vsel %vm1140, %v1125, %v894
      %v1160 = vsel %vm1140, %v1127, %v896
      %v1162 = vsel %vm1140, %v1129, %v898
      %v1164 = vsel %vm1140, %v1131, %v900
      %v1166 = vsel %vm1140, %v1133, %v902
      %v1168 = vsel %vm1140, %v1135, %v904
      %v1170 = vsel %vm1140, %v1137, %v906
      %v1172 = vsel %vm1140, %v1139, %v908
      %v1173 = vld [vmem:[%s1] sm:$0xf]
      %v1174 = vld [vmem:[%s1 + $0x4] sm:$0xf]
      %v1175 = vld [vmem:[%s1 + $0x8] sm:$0xf]
      %v1176 = vld [vmem:[%s1 + $0xc] sm:$0xf]
      %v1177 = vld [vmem:[%s1 + $0x10] sm:$0x3]
      %v1183 = vunpack.c.l.b16 %v1173
      %v1184 = vunpack.c.l.b16 %v1174
      %v1185 = vunpack.c.l.b16 %v1175
      %v1186 = vunpack.c.l.b16 %v1176
      %v1187 = vunpack.c.l.b16 %v1177
      %v1188 = vpack.c.b16 %v1184, %v1183
      %v1189 = vpack.c.b16 %v1186, %v1185
      %v1190 = vpack.c.b16 %v1187, %v1187
      %vm1193 = vcmask 293888
      %v1194 = vsel %vm1193, %v1142, 0
      %v1196 = vsel %vm1193, %v1144, 0
      %v1198 = vsel %vm1193, %v1146, 0
      %v1200 = vsel %vm1193, %v1148, 0
      %v1202 = vsel %vm1193, %v1150, 0
      %v1204 = vsel %vm1193, %v1152, 0
      %v1206 = vsel %vm1193, %v1154, 0
      %v1208 = vsel %vm1193, %v1156, 0
      %v1210 = vsel %vm1193, %v1158, 0
      %v1212 = vsel %vm1193, %v1160, 0
      %v1214 = vsel %vm1193, %v1162, 0
      %v1216 = vsel %vm1193, %v1164, 0
      %v1218 = vsel %vm1193, %v1166, 0
      %v1220 = vsel %vm1193, %v1168, 0
      %v1222 = vsel %vm1193, %v1170, 0
      %v1224 = vsel %vm1193, %v1172, 0
      %vm1226 = vcmask 1041408
      %v1228 = vsel %vm1226, %v1190, 0
      %1230 = vmatpush.bf16.msra.mxu0 0
      %1231 = vmatpush.bf16.msra.mxu0 0
      %1232 = vmatpush.bf16.msra.mxu0 0
      %1233 = vmatpush.bf16.msra.mxu0 0
      %1234 = vmatpush.bf16.msra.mxu0 0
      %1235 = vmatpush.bf16.msra.mxu0 %v1228
      %1236 = vmatpush.bf16.msra.mxu0 %v1189
      %1237 = vmatpush.bf16.msra.mxu0 %v1188
      %1238 = vmatmul.bf16.gmra.mxu0 %v1194
      %v1239 = vpop.f32.mrf.mxu0
      %v1240 = vadd.f32 0.0, %v1239
      %v1241 = vpop.f32.mrf.mxu0
      %v1242 = vadd.f32 0.0, %v1241
      %1243 = vmatmul.bf16.gmra.mxu0 %v1196
      %v1244 = vpop.f32.mrf.mxu0
      %v1245 = vadd.f32 0.0, %v1244
      %v1246 = vpop.f32.mrf.mxu0
      %v1247 = vadd.f32 0.0, %v1246
      %1248 = vmatmul.bf16.gmra.mxu0 %v1198
      %v1249 = vpop.f32.mrf.mxu0
      %v1250 = vadd.f32 0.0, %v1249
      %v1251 = vpop.f32.mrf.mxu0
      %v1252 = vadd.f32 0.0, %v1251
      %1253 = vmatmul.bf16.gmra.mxu0 %v1200
      %v1254 = vpop.f32.mrf.mxu0
      %v1255 = vadd.f32 0.0, %v1254
      %v1256 = vpop.f32.mrf.mxu0
      %v1257 = vadd.f32 0.0, %v1256
      %1258 = vmatmul.bf16.gmra.mxu0 %v1202
      %v1259 = vpop.f32.mrf.mxu0
      %v1260 = vadd.f32 0.0, %v1259
      %v1261 = vpop.f32.mrf.mxu0
      %v1262 = vadd.f32 0.0, %v1261
      %1263 = vmatmul.bf16.gmra.mxu0 %v1204
      %v1264 = vpop.f32.mrf.mxu0
      %v1265 = vadd.f32 0.0, %v1264
      %v1266 = vpop.f32.mrf.mxu0
      %v1267 = vadd.f32 0.0, %v1266
      %1268 = vmatmul.bf16.gmra.mxu0 %v1206
      %v1269 = vpop.f32.mrf.mxu0
      %v1270 = vadd.f32 0.0, %v1269
      %v1271 = vpop.f32.mrf.mxu0
      %v1272 = vadd.f32 0.0, %v1271
      %1273 = vmatmul.bf16.gmra.mxu0 %v1208
      %v1274 = vpop.f32.mrf.mxu0
      %v1275 = vadd.f32 0.0, %v1274
      %v1276 = vpop.f32.mrf.mxu0
      %v1277 = vadd.f32 0.0, %v1276
      %1278 = vmatmul.bf16.gmra.mxu0 %v1210
      %v1279 = vpop.f32.mrf.mxu0
      %v1280 = vadd.f32 0.0, %v1279
      %v1281 = vpop.f32.mrf.mxu0
      %v1282 = vadd.f32 0.0, %v1281
      %1283 = vmatmul.bf16.gmra.mxu0 %v1212
      %v1284 = vpop.f32.mrf.mxu0
      %v1285 = vadd.f32 0.0, %v1284
      %v1286 = vpop.f32.mrf.mxu0
      %v1287 = vadd.f32 0.0, %v1286
      %1288 = vmatmul.bf16.gmra.mxu0 %v1214
      %v1289 = vpop.f32.mrf.mxu0
      %v1290 = vadd.f32 0.0, %v1289
      %v1291 = vpop.f32.mrf.mxu0
      %v1292 = vadd.f32 0.0, %v1291
      %1293 = vmatmul.bf16.gmra.mxu0 %v1216
      %v1294 = vpop.f32.mrf.mxu0
      %v1295 = vadd.f32 0.0, %v1294
      %v1296 = vpop.f32.mrf.mxu0
      %v1297 = vadd.f32 0.0, %v1296
      %1298 = vmatmul.bf16.gmra.mxu0 %v1218
      %v1299 = vpop.f32.mrf.mxu0
      %v1300 = vadd.f32 0.0, %v1299
      %v1301 = vpop.f32.mrf.mxu0
      %v1302 = vadd.f32 0.0, %v1301
      %1303 = vmatmul.bf16.gmra.mxu0 %v1220
      %v1304 = vpop.f32.mrf.mxu0
      %v1305 = vadd.f32 0.0, %v1304
      %v1306 = vpop.f32.mrf.mxu0
      %v1307 = vadd.f32 0.0, %v1306
      %1308 = vmatmul.bf16.gmra.mxu0 %v1222
      %v1309 = vpop.f32.mrf.mxu0
      %v1310 = vadd.f32 0.0, %v1309
      %v1311 = vpop.f32.mrf.mxu0
      %v1312 = vadd.f32 0.0, %v1311
      %1313 = vmatmul.bf16.gmra.mxu0 %v1224
      %v1314 = vpop.f32.mrf.mxu0
      %v1315 = vadd.f32 0.0, %v1314
      %v1316 = vpop.f32.mrf.mxu0
      %v1317 = vadd.f32 0.0, %v1316
      %1318 = vdwg.mxu0
      %v1319 = vsel %vm1140, %v1240, 0.0
      %v1320 = vsel %vm1140, %v1242, 0.0
      %v1321 = vadd.f32 %v1319, %v1320
      %v1322 = vsel %vm1140, %v1245, 0.0
      %v1323 = vadd.f32 %v1321, %v1322
      %v1324 = vsel %vm1140, %v1247, 0.0
      %v1325 = vadd.f32 %v1323, %v1324
      %v1326 = vsel %vm1140, %v1250, 0.0
      %v1327 = vadd.f32 %v1325, %v1326
      %v1328 = vsel %vm1140, %v1252, 0.0
      %v1329 = vadd.f32 %v1327, %v1328
      %v1330 = vsel %vm1140, %v1255, 0.0
      %v1331 = vadd.f32 %v1329, %v1330
      %v1332 = vsel %vm1140, %v1257, 0.0
      %v1333 = vadd.f32 %v1331, %v1332
      %v1334 = vsel %vm1140, %v1260, 0.0
      %v1335 = vadd.f32 %v1333, %v1334
      %v1336 = vsel %vm1140, %v1262, 0.0
      %v1337 = vadd.f32 %v1335, %v1336
      %v1338 = vsel %vm1140, %v1265, 0.0
      %v1339 = vadd.f32 %v1337, %v1338
      %v1340 = vsel %vm1140, %v1267, 0.0
      %v1341 = vadd.f32 %v1339, %v1340
      %v1342 = vsel %vm1140, %v1270, 0.0
      %v1343 = vadd.f32 %v1341, %v1342
      %v1344 = vsel %vm1140, %v1272, 0.0
      %v1345 = vadd.f32 %v1343, %v1344
      %v1346 = vsel %vm1140, %v1275, 0.0
      %v1347 = vadd.f32 %v1345, %v1346
      %v1348 = vsel %vm1140, %v1277, 0.0
      %v1349 = vadd.f32 %v1347, %v1348
      %v1350 = vsel %vm1140, %v1280, 0.0
      %v1351 = vadd.f32 %v1349, %v1350
      %v1352 = vsel %vm1140, %v1282, 0.0
      %v1353 = vadd.f32 %v1351, %v1352
      %v1354 = vsel %vm1140, %v1285, 0.0
      %v1355 = vadd.f32 %v1353, %v1354
      %v1356 = vsel %vm1140, %v1287, 0.0
      %v1357 = vadd.f32 %v1355, %v1356
      %v1358 = vsel %vm1140, %v1290, 0.0
      %v1359 = vadd.f32 %v1357, %v1358
      %v1360 = vsel %vm1140, %v1292, 0.0
      %v1361 = vadd.f32 %v1359, %v1360
      %v1362 = vsel %vm1140, %v1295, 0.0
      %v1363 = vadd.f32 %v1361, %v1362
      %v1364 = vsel %vm1140, %v1297, 0.0
      %v1365 = vadd.f32 %v1363, %v1364
      %v1366 = vsel %vm1140, %v1300, 0.0
      %v1367 = vadd.f32 %v1365, %v1366
      %v1368 = vsel %vm1140, %v1302, 0.0
      %v1369 = vadd.f32 %v1367, %v1368
      %v1370 = vsel %vm1140, %v1305, 0.0
      %v1371 = vadd.f32 %v1369, %v1370
      %v1372 = vsel %vm1140, %v1307, 0.0
      %v1373 = vadd.f32 %v1371, %v1372
      %v1374 = vsel %vm1140, %v1310, 0.0
      %v1375 = vadd.f32 %v1373, %v1374
      %v1376 = vsel %vm1140, %v1312, 0.0
      %v1377 = vadd.f32 %v1375, %v1376
      %v1378 = vsel %vm1140, %v1315, 0.0
      %v1379 = vadd.f32 %v1377, %v1378
      %v1380 = vsel %vm1140, %v1317, 0.0
      %v1381 = vadd.f32 %v1379, %v1380
      %v1382 = vrot.slane %v1381, 4
      %v1383 = vadd.f32 %v1381, %v1382
      %v1384 = vrot.slane %v1383, 2
      %v1385 = vadd.f32 %v1383, %v1384
      %v1386 = vrot.slane %v1385, 1
      %v1387 = vadd.f32 %v1385, %v1386
      %v1388 = vmul.f32 %v1240, %v1240
      %v1389 = vmul.f32 %v1242, %v1242
      %v1390 = vmul.f32 %v1245, %v1245
      %v1391 = vmul.f32 %v1247, %v1247
      %v1392 = vmul.f32 %v1250, %v1250
      %v1393 = vmul.f32 %v1252, %v1252
      %v1394 = vmul.f32 %v1255, %v1255
      %v1395 = vmul.f32 %v1257, %v1257
      %v1396 = vmul.f32 %v1260, %v1260
      %v1397 = vmul.f32 %v1262, %v1262
      %v1398 = vmul.f32 %v1265, %v1265
      %v1399 = vmul.f32 %v1267, %v1267
      %v1400 = vmul.f32 %v1270, %v1270
      %v1401 = vmul.f32 %v1272, %v1272
      %v1402 = vmul.f32 %v1275, %v1275
      %v1403 = vmul.f32 %v1277, %v1277
      %v1404 = vmul.f32 %v1280, %v1280
      %v1405 = vmul.f32 %v1282, %v1282
      %v1406 = vmul.f32 %v1285, %v1285
      %v1407 = vmul.f32 %v1287, %v1287
      %v1408 = vmul.f32 %v1290, %v1290
      %v1409 = vmul.f32 %v1292, %v1292
      %v1410 = vmul.f32 %v1295, %v1295
      %v1411 = vmul.f32 %v1297, %v1297
      %v1412 = vmul.f32 %v1300, %v1300
      %v1413 = vmul.f32 %v1302, %v1302
      %v1414 = vmul.f32 %v1305, %v1305
      %v1415 = vmul.f32 %v1307, %v1307
      %v1416 = vmul.f32 %v1310, %v1310
      %v1417 = vmul.f32 %v1312, %v1312
      %v1418 = vmul.f32 %v1315, %v1315
      %v1419 = vmul.f32 %v1317, %v1317
      %v1420 = vsel %vm1140, %v1388, 0.0
      %v1421 = vsel %vm1140, %v1389, 0.0
      %v1422 = vadd.f32 %v1420, %v1421
      %v1423 = vsel %vm1140, %v1390, 0.0
      %v1424 = vadd.f32 %v1422, %v1423
      %v1425 = vsel %vm1140, %v1391, 0.0
      %v1426 = vadd.f32 %v1424, %v1425
      %v1427 = vsel %vm1140, %v1392, 0.0
      %v1428 = vadd.f32 %v1426, %v1427
      %v1429 = vsel %vm1140, %v1393, 0.0
      %v1430 = vadd.f32 %v1428, %v1429
      %v1431 = vsel %vm1140, %v1394, 0.0
      %v1432 = vadd.f32 %v1430, %v1431
      %v1433 = vsel %vm1140, %v1395, 0.0
      %v1434 = vadd.f32 %v1432, %v1433
      %v1435 = vsel %vm1140, %v1396, 0.0
      %v1436 = vadd.f32 %v1434, %v1435
      %v1437 = vsel %vm1140, %v1397, 0.0
      %v1438 = vadd.f32 %v1436, %v1437
      %v1439 = vsel %vm1140, %v1398, 0.0
      %v1440 = vadd.f32 %v1438, %v1439
      %v1441 = vsel %vm1140, %v1399, 0.0
      %v1442 = vadd.f32 %v1440, %v1441
      %v1443 = vsel %vm1140, %v1400, 0.0
      %v1444 = vadd.f32 %v1442, %v1443
      %v1445 = vsel %vm1140, %v1401, 0.0
      %v1446 = vadd.f32 %v1444, %v1445
      %v1447 = vsel %vm1140, %v1402, 0.0
      %v1448 = vadd.f32 %v1446, %v1447
      %v1449 = vsel %vm1140, %v1403, 0.0
      %v1450 = vadd.f32 %v1448, %v1449
      %v1451 = vsel %vm1140, %v1404, 0.0
      %v1452 = vadd.f32 %v1450, %v1451
      %v1453 = vsel %vm1140, %v1405, 0.0
      %v1454 = vadd.f32 %v1452, %v1453
      %v1455 = vsel %vm1140, %v1406, 0.0
      %v1456 = vadd.f32 %v1454, %v1455
      %v1457 = vsel %vm1140, %v1407, 0.0
      %v1458 = vadd.f32 %v1456, %v1457
      %v1459 = vsel %vm1140, %v1408, 0.0
      %v1460 = vadd.f32 %v1458, %v1459
      %v1461 = vsel %vm1140, %v1409, 0.0
      %v1462 = vadd.f32 %v1460, %v1461
      %v1463 = vsel %vm1140, %v1410, 0.0
      %v1464 = vadd.f32 %v1462, %v1463
      %v1465 = vsel %vm1140, %v1411, 0.0
      %v1466 = vadd.f32 %v1464, %v1465
      %v1467 = vsel %vm1140, %v1412, 0.0
      %v1468 = vadd.f32 %v1466, %v1467
      %v1469 = vsel %vm1140, %v1413, 0.0
      %v1470 = vadd.f32 %v1468, %v1469
      %v1471 = vsel %vm1140, %v1414, 0.0
      %v1472 = vadd.f32 %v1470, %v1471
      %v1473 = vsel %vm1140, %v1415, 0.0
      %v1474 = vadd.f32 %v1472, %v1473
      %v1475 = vsel %vm1140, %v1416, 0.0
      %v1476 = vadd.f32 %v1474, %v1475
      %v1477 = vsel %vm1140, %v1417, 0.0
      %v1478 = vadd.f32 %v1476, %v1477
      %v1479 = vsel %vm1140, %v1418, 0.0
      %v1480 = vadd.f32 %v1478, %v1479
      %v1481 = vsel %vm1140, %v1419, 0.0
      %v1482 = vadd.f32 %v1480, %v1481
      %v1483 = vrot.slane %v1482, 4
      %v1484 = vadd.f32 %v1482, %v1483
      %v1485 = vrot.slane %v1484, 2
      %v1486 = vadd.f32 %v1484, %v1485
      %v1487 = vrot.slane %v1486, 1
      %v1488 = vadd.f32 %v1486, %v1487
      %vm1489 = vcmask 1040384
      %v1490 = vsel %vm1489, %v1387, %v1488
      %vm1491 = vcmask 254976
      %1492 = vst.msk [vmem:[%s181] sm:$0x3] %vm1491, %v1490
      %v1493 = vpack.c.bf16 %v1240, %v1240
      %v1494 = vpack.c.bf16 %v1242, %v1242
      %v1495 = vpack.c.bf16 %v1245, %v1245
      %v1496 = vpack.c.bf16 %v1247, %v1247
      %v1497 = vpack.c.bf16 %v1250, %v1250
      %v1498 = vpack.c.bf16 %v1252, %v1252
      %v1499 = vpack.c.bf16 %v1255, %v1255
      %v1500 = vpack.c.bf16 %v1257, %v1257
      %v1501 = vpack.c.bf16 %v1260, %v1260
      %v1502 = vpack.c.bf16 %v1262, %v1262
      %v1503 = vpack.c.bf16 %v1265, %v1265
      %v1504 = vpack.c.bf16 %v1267, %v1267
      %v1505 = vpack.c.bf16 %v1270, %v1270
      %v1506 = vpack.c.bf16 %v1272, %v1272
      %v1507 = vpack.c.bf16 %v1275, %v1275
      %v1508 = vpack.c.bf16 %v1277, %v1277
      %v1509 = vpack.c.bf16 %v1280, %v1280
      %v1510 = vpack.c.bf16 %v1282, %v1282
      %v1511 = vpack.c.bf16 %v1285, %v1285
      %v1512 = vpack.c.bf16 %v1287, %v1287
      %v1513 = vpack.c.bf16 %v1290, %v1290
      %v1514 = vpack.c.bf16 %v1292, %v1292
      %v1515 = vpack.c.bf16 %v1295, %v1295
      %v1516 = vpack.c.bf16 %v1297, %v1297
      %v1517 = vpack.c.bf16 %v1300, %v1300
      %v1518 = vpack.c.bf16 %v1302, %v1302
      %v1519 = vpack.c.bf16 %v1305, %v1305
      %v1520 = vpack.c.bf16 %v1307, %v1307
      %v1521 = vpack.c.bf16 %v1310, %v1310
      %v1522 = vpack.c.bf16 %v1312, %v1312
      %v1523 = vpack.c.bf16 %v1315, %v1315
      %v1524 = vpack.c.bf16 %v1317, %v1317
      %vm1525 = vcmask 257024
      %1526 = vst.msk [vmem:[%s177] sm:$0xf] %vm1525, %v1493
      %1527 = vst.msk [vmem:[%s177 + $0x4] sm:$0xf] %vm1525, %v1494
      %1528 = vst.msk [vmem:[%s177 + $0x8] sm:$0xf] %vm1525, %v1495
      %1529 = vst.msk [vmem:[%s177 + $0xc] sm:$0xf] %vm1525, %v1496
      %1530 = vst.msk [vmem:[%s177 + $0x10] sm:$0xf] %vm1525, %v1497
      %1531 = vst.msk [vmem:[%s177 + $0x14] sm:$0xf] %vm1525, %v1498
      %1532 = vst.msk [vmem:[%s177 + $0x18] sm:$0xf] %vm1525, %v1499
      %1533 = vst.msk [vmem:[%s177 + $0x1c] sm:$0xf] %vm1525, %v1500
      %1534 = vst.msk [vmem:[%s177 + $0x20] sm:$0xf] %vm1525, %v1501
      %1535 = vst.msk [vmem:[%s177 + $0x24] sm:$0xf] %vm1525, %v1502
      %1536 = vst.msk [vmem:[%s177 + $0x28] sm:$0xf] %vm1525, %v1503
      %1537 = vst.msk [vmem:[%s177 + $0x2c] sm:$0xf] %vm1525, %v1504
      %1538 = vst.msk [vmem:[%s177 + $0x30] sm:$0xf] %vm1525, %v1505
      %1539 = vst.msk [vmem:[%s177 + $0x34] sm:$0xf] %vm1525, %v1506
      %1540 = vst.msk [vmem:[%s177 + $0x38] sm:$0xf] %vm1525, %v1507
      %1541 = vst.msk [vmem:[%s177 + $0x3c] sm:$0xf] %vm1525, %v1508
      %1542 = vst.msk [vmem:[%s177 + $0x40] sm:$0xf] %vm1525, %v1509
      %1543 = vst.msk [vmem:[%s177 + $0x44] sm:$0xf] %vm1525, %v1510
      %1544 = vst.msk [vmem:[%s177 + $0x48] sm:$0xf] %vm1525, %v1511
      %1545 = vst.msk [vmem:[%s177 + $0x4c] sm:$0xf] %vm1525, %v1512
      %1546 = vst.msk [vmem:[%s177 + $0x50] sm:$0xf] %vm1525, %v1513
      %1547 = vst.msk [vmem:[%s177 + $0x54] sm:$0xf] %vm1525, %v1514
      %1548 = vst.msk [vmem:[%s177 + $0x58] sm:$0xf] %vm1525, %v1515
      %1549 = vst.msk [vmem:[%s177 + $0x5c] sm:$0xf] %vm1525, %v1516
      %1550 = vst.msk [vmem:[%s177 + $0x60] sm:$0xf] %vm1525, %v1517
      %1551 = vst.msk [vmem:[%s177 + $0x64] sm:$0xf] %vm1525, %v1518
      %1552 = vst.msk [vmem:[%s177 + $0x68] sm:$0xf] %vm1525, %v1519
      %1553 = vst.msk [vmem:[%s177 + $0x6c] sm:$0xf] %vm1525, %v1520
      %1554 = vst.msk [vmem:[%s177 + $0x70] sm:$0xf] %vm1525, %v1521
      %1555 = vst.msk [vmem:[%s177 + $0x74] sm:$0xf] %vm1525, %v1522
      %1556 = vst.msk [vmem:[%s177 + $0x78] sm:$0xf] %vm1525, %v1523
      %1557 = vst.msk [vmem:[%s177 + $0x7c] sm:$0xf] %vm1525, %v1524
      %p1558 = scmp.lt.s32.totalorder %s15, 1
      %s1559 = scalar_select %p1558, %s15, 1
      %s1560 = smul.addr %s1559, 32
      %s1561 = smul.addr %s1560, 4
      %s1562 = scalar_lea.vmem %s2, %s1561
      %p1563 = scmp.lt.s32.totalorder %s15, 1
      %s1564 = scalar_select %p1563, %s15, 1
      %s1565 = smul.addr %s1564, 2
      %s1566 = scalar_lea.vmem %s3, %s1565
      // Predicated region
      $region29: #{_conv_trans2d_block_impl.1} parent=27 // pred_check
        %p1567 = pneg %p80
      $region30: #{_conv_trans2d_block_impl.1} parent=27 // pred_check_branch
        %1569 = sbr.rel (%p1567) target = $region32
      $region31: #{_conv_trans2d_block_impl.1} parent=27 // pred_region
        _
      $region32: #{_conv_trans2d_block_impl.1} parent=27 // pred_fallthru
        _
      // Predicated region
      $region33: #{_conv_trans2d_block_impl.1} parent=27 // pred_check
        %p1570 = pneg %p106
      $region34: #{_conv_trans2d_block_impl.1} parent=27 // pred_check_branch
        %1572 = sbr.rel (%p1570) target = $region36
      $region35: #{_conv_trans2d_block_impl.1} parent=27 // pred_region
        _
      $region36: #{_conv_trans2d_block_impl.1} parent=27 // pred_fallthru
        _
    $region28: #{_conv_trans2d_block_impl.1} parent=5 // pred_fallthru
      _
    %p1573 = scmp.le.s32.totalorder 2, %s10
    // Predicated region
    $region37: #{_conv_trans2d_block_impl.1} parent=5 // pred_check
      %p1574 = pneg %p1573
    $region38: #{_conv_trans2d_block_impl.1} parent=5 // pred_check_branch
      %1576 = sbr.rel (%p1574) target = $region40
    $region39: #{_conv_trans2d_block_impl.1} parent=5 // pred_region
      %s1577 = ssub.s32 %s10, 2
      // Predicated region
      $region41: #{_conv_trans2d_block_impl.1} parent=39 // pred_check
        %p1578 = pneg %p86
      $region42: #{_conv_trans2d_block_impl.1} parent=39 // pred_check_branch
        %1580 = sbr.rel (%p1578) target = $region44
      $region43: #{_conv_trans2d_block_impl.1} parent=39 // pred_region
        %p1581 = scmp.lt.s32.totalorder %s16, 1
        %s1582 = scalar_select %p1581, %s16, 1
        %s1583 = smul.addr %s1582, 32
        %s1584 = smul.addr %s1583, 4
        %s1585 = scalar_lea.vmem %s2, %s1584
      $region44: #{_conv_trans2d_block_impl.1} parent=39 // pred_fallthru
        _
      // Predicated region
      $region45: #{_conv_trans2d_block_impl.1} parent=39 // pred_check
        %p1586 = pneg %p112
      $region46: #{_conv_trans2d_block_impl.1} parent=39 // pred_check_branch
        %1588 = sbr.rel (%p1586) target = $region48
      $region47: #{_conv_trans2d_block_impl.1} parent=39 // pred_region
        %p1589 = scmp.lt.s32.totalorder %s16, 1
        %s1590 = scalar_select %p1589, %s16, 1
        %s1591 = smul.addr %s1590, 2
        %s1592 = scalar_lea.vmem %s3, %s1591
      $region48: #{_conv_trans2d_block_impl.1} parent=39 // pred_fallthru
        _
    $region40: #{_conv_trans2d_block_impl.1} parent=5 // pred_fallthru
      _
  $region6: #{_conv_trans2d_block_impl.1} parent=0 // loop_footer
    %s14 = sadd.s32 1, %s10
  $region7: #{_conv_trans2d_block_impl.1} parent=0 // loop_footer_branch
    %9 = sbr.rel target = $region3
  $region8: #{_conv_trans2d_block_impl.1} parent=0 // loop_exit
    _

</llo_original>
